<compile_context>
chip_gen: v6e
topology: v6e:2x2x1
jax: 0.10.0
libtpu: 0.0.40
codegen_flags: <defaults>
</compile_context>

<pallas_src>
import functools

import jax
import jax.numpy as jnp
from jax import lax
from jax.experimental import pallas as pl
from jax.experimental.pallas import tpu as pltpu

# Module hyperparameters.  graph_out_chs + emb_size must satisfy the module's
# hard-coded Linear(1200, 1): 16 * L3 == 1200  ->  graph_out_chs + emb_size = 300.
MAX_NODES = 8
GRAPH_OUT_CHS = 200
EMB_SIZE = 100
BATCH = 2

C1_OUT, C1_K, C1_PAD = 64, 3, 1   # feature1 = Conv1d(max_nodes, 64, k=3, pad=1)
C2_OUT, C2_K, C2_PAD = 16, 2, 1   # feature2 = Conv1d(64, 16, k=2, pad=1)
MP1_K, MP1_S = 3, 2               # maxpool1
MP2_K, MP2_S = 2, 2               # maxpool2


def _branch_lens(L):
    L1 = (L - MP1_K) // MP1_S + 1          # after maxpool1
    L2 = L1 + 2 * C2_PAD - C2_K + 1        # after conv2 (pad 1, k 2)
    L3 = (L2 - MP2_K) // MP2_S + 1         # after maxpool2
    return L1, L2, L3


# ----------------------------- Pallas kernel ------------------------------

def _readout_branch_kernel(g_ref, w1_ref, b1_ref, w2_ref, b2_ref,
                           wm_ref, bm_ref, mask_ref, out_ref, *, batch):
    """One branch per grid step.  Pool strides are pre-folded into the column
    grouping of g (phase-grouped im2col), so no strided ops / selection
    matmuls are needed in-kernel."""
    dot = functools.partial(jnp.dot, preferred_element_type=jnp.float32)
    n = g_ref.shape[2] // 4          # columns per phase block (= L3, padded)
    co1 = batch * C1_OUT             # rows of conv1 output (batch-stacked)
    co2 = batch * C2_OUT             # rows of conv2 output

    # Conv1d #1: single im2col matmul; output columns grouped by pos mod 4.
    c1 = dot(w1_ref[...], g_ref[0])                               # (co1, 4n)
    r1 = jnp.maximum(c1 + b1_ref[...], 0.0)

    ph0 = r1[:, 0 * n:1 * n]
    ph1 = r1[:, 1 * n:2 * n]
    ph2 = r1[:, 2 * n:3 * n]
    ph3 = r1[:, 3 * n:4 * n]

    # MaxPool1d(3, 2) with the stride folded in: even / odd pooled outputs.
    mp1_even = jnp.maximum(jnp.maximum(ph0, ph1), ph2)            # (co1, n)
    zc1 = jnp.zeros((co1, 1), jnp.float32)
    ph0_next = jnp.concatenate([ph0[:, 1:], zc1], axis=1)
    mp1_odd = jnp.maximum(jnp.maximum(ph2, ph3), ph0_next) * mask_ref[0]

    # Conv1d #2 (k=2, pad=1): both taps stacked along M -> one matmul per
    # phase; the pad-by-1 becomes a one-column shift of the tap-0/odd result.
    ab = dot(w2_ref[...], mp1_even)                               # (2*co2, n)
    cd = dot(w2_ref[...], mp1_odd)                                # (2*co2, n)
    t0e, t1e = ab[:co2], ab[co2:]      # W2_0 @ even, W2_1 @ even
    t0o, t1o = cd[:co2], cd[co2:]      # W2_0 @ odd,  W2_1 @ odd
    zc2 = jnp.zeros((co2, 1), jnp.float32)
    c2_even = t1e + jnp.concatenate([zc2, t0o[:, :n - 1]], axis=1)
    c2_odd = t0e + t1o

    b2 = b2_ref[...]
    r2_even = jnp.maximum(c2_even + b2, 0.0)
    r2_odd = jnp.maximum(c2_odd + b2, 0.0)

    # MaxPool1d(2, 2): elementwise max of the even/odd conv2 outputs.
    mp2 = jnp.maximum(r2_even, r2_odd)                            # (co2, n)

    # Linear(16 * L3 -> 1), per batch element (rows are batch-stacked).
    per_row = jnp.sum(mp2 * wm_ref[0], axis=1, keepdims=True)     # (co2, 1)
    outs = []
    for b in range(batch):
        s = jnp.sum(per_row[b * C2_OUT:(b + 1) * C2_OUT, :],
                    axis=0, keepdims=True)                        # (1, 1)
        outs.append(s + bm_ref[0])
    out_ref[0] = jnp.concatenate(outs, axis=1)                    # (1, batch)


# ------------------------------ host-side glue ------------------------------

def _block_diag(w, batch):
    """(Cout, Cin) -> (batch*Cout, batch*Cin) block-diagonal."""
    return jnp.kron(jnp.eye(batch, dtype=w.dtype), w)


def prepare_readout_params(params, batch=BATCH):
    """One-time packing of all parameter-derived kernel constants."""
    Lz = GRAPH_OUT_CHS + EMB_SIZE
    Ly = GRAPH_OUT_CHS
    L1z, _, L3z = _branch_lens(Lz)
    L1y, _, L3y = _branch_lens(Ly)
    nmax = max(Lz, Ly) // 4                   # = L3z for these sizes

    w1, w2 = params["w1"], params["w2"]
    # Conv1 taps merged along K: (batch*64, C1_K*batch*8).
    w1cat = jnp.concatenate(
        [_block_diag(w1[:, :, k], batch) for k in range(C1_K)], axis=1)
    # Conv2 taps stacked along M: (C2_K*batch*16, batch*64).
    w2cat = jnp.concatenate(
        [_block_diag(w2[:, :, k], batch) for k in range(C2_K)], axis=0)
    b1s = jnp.tile(params["b1"][:, None], (batch, 1))          # (batch*64, 1)
    b2s = jnp.tile(params["b2"][:, None], (batch, 1))          # (batch*16, 1)

    def pack_wm(w, L3):
        wm = w.reshape(C2_OUT, L3)
        wm = jnp.pad(wm, ((0, 0), (0, nmax - L3)))             # zero-pad tail
        return jnp.tile(wm, (batch, 1))                        # (batch*16, nmax)

    wm = jnp.stack([pack_wm(params["mlp1_w"], L3z),
                    pack_wm(params["mlp2_w"], L3y)])           # (2, batch*16, nmax)
    bm = jnp.stack([params["mlp1_b"].reshape(1, 1),
                    params["mlp2_b"].reshape(1, 1)])           # (2, 1, 1)

    def odd_mask(L1):
        n_odd = L1 // 2                                        # valid odd pool positions
        return (jnp.arange(nmax) < n_odd).astype(jnp.float32)[None, :]

    mask = jnp.stack([odd_mask(L1z), odd_mask(L1y)])           # (2, 1, nmax)

    return {"w1cat": w1cat, "b1": b1s, "w2cat": w2cat, "b2": b2s,
            "wm": wm, "bm": bm, "mask": mask}


def _phase_im2col(x_ncl, n_pad):
    """(B, C, L) -> (C1_K*B*C, 4*n_pad) conv1 im2col with the output columns
    grouped by output position mod 4 (pool strides folded in).  Each phase
    block is zero-padded independently to n_pad columns."""
    B, C, L = x_ncl.shape
    assert L % 4 == 0
    n = L // 4
    xp = jnp.pad(x_ncl, ((0, 0), (0, 0), (C1_PAD, C1_PAD)))
    xp = xp.reshape(B * C, L + 2 * C1_PAD)
    blocks = []
    for m in range(4):
        taps = [xp[:, m + k: m + k + 4 * n: 4] for k in range(C1_K)]  # (BC, n)
        blk = jnp.concatenate(taps, axis=0)                           # (3BC, n)
        if n_pad > n:
            blk = jnp.pad(blk, ((0, 0), (0, n_pad - n)))
        blocks.append(blk)
    return jnp.concatenate(blocks, axis=1)                            # (3BC, 4*n_pad)


def _readout_forward(h, x, prep):
    """Pallas implementation of Readout.forward(h, x) -> (batch,)."""
    B = h.shape[0] // MAX_NODES
    Dz = h.shape[1] + x.shape[1]
    Dy = h.shape[1]
    nmax = prep["wm"].shape[2]

    z = jnp.concatenate([h, x], axis=1).reshape(B, MAX_NODES, Dz)
    y = h.reshape(B, MAX_NODES, Dy)
    g = jnp.stack([_phase_im2col(z, nmax),
                   _phase_im2col(y, nmax)])                 # (2, 3*B*8, 4*nmax)

    kc = C1_K * B * MAX_NODES
    co1 = B * C1_OUT
    co2 = B * C2_OUT

    kernel = functools.partial(_readout_branch_kernel, batch=B)
    out = pl.pallas_call(
        kernel,
        out_shape=jax.ShapeDtypeStruct((2, 1, B), jnp.float32),
        grid=(2,),
        in_specs=[
            pl.BlockSpec((1, kc, 4 * nmax), lambda i: (i, 0, 0)),   # g (per branch)
            pl.BlockSpec((co1, kc), lambda i: (0, 0)),              # w1cat (shared)
            pl.BlockSpec((co1, 1), lambda i: (0, 0)),               # b1
            pl.BlockSpec((2 * co2, co1), lambda i: (0, 0)),         # w2cat
            pl.BlockSpec((co2, 1), lambda i: (0, 0)),               # b2
            pl.BlockSpec((1, co2, nmax), lambda i: (i, 0, 0)),      # wm (per branch)
            pl.BlockSpec((1, 1, 1), lambda i: (i, 0, 0)),           # bm
            pl.BlockSpec((1, 1, nmax), lambda i: (i, 0, 0)),        # odd mask
        ],
        out_specs=pl.BlockSpec((1, 1, B), lambda i: (i, 0, 0)),
        compiler_params=pltpu.CompilerParams(
            dimension_semantics=("parallel",)),
    )(g, prep["w1cat"], prep["b1"], prep["w2cat"], prep["b2"],
      prep["wm"], prep["bm"], prep["mask"])

    out_z = out[0, 0]
    out_y = out[1, 0]
    return jax.nn.sigmoid(out_z * out_y)


readout_forward = jax.jit(_readout_forward)


# ------------------------------ plain-JAX reference ------------------------------

def _ref_branch(x_ncl, w1, b1, w2, b2, mlp_w, mlp_b):
    dn = ("NCH", "OIH", "NCH")
    neg_inf = jnp.array(-jnp.inf, dtype=x_ncl.dtype)
    c1 = lax.conv_general_dilated(x_ncl, w1, (1,), [(C1_PAD, C1_PAD)],
                                  dimension_numbers=dn,
                                  precision=lax.Precision.HIGHEST)
    r1 = jnp.maximum(c1 + b1[None, :, None], 0.0)
    mp1 = lax.reduce_window(r1, neg_inf, lax.max, (1, 1, MP1_K), (1, 1, MP1_S), "VALID")
    c2 = lax.conv_general_dilated(mp1, w2, (1,), [(C2_PAD, C2_PAD)],
                                  dimension_numbers=dn,
                                  precision=lax.Precision.HIGHEST)
    r2 = jnp.maximum(c2 + b2[None, :, None], 0.0)
    mp2 = lax.reduce_window(r2, neg_inf, lax.max, (1, 1, MP2_K), (1, 1, MP2_S), "VALID")
    flat = mp2.reshape(mp2.shape[0], -1)
    return flat @ mlp_w.T + mlp_b


def ref_forward(h, x, params):
    B = h.shape[0] // MAX_NODES
    z = jnp.concatenate([h, x], axis=1).reshape(B, MAX_NODES,
                                                h.shape[1] + x.shape[1])
    y = h.reshape(B, MAX_NODES, h.shape[1])
    out_z = _ref_branch(z, params["w1"], params["b1"], params["w2"],
                        params["b2"], params["mlp1_w"], params["mlp1_b"])
    out_y = _ref_branch(y, params["w1"], params["b1"], params["w2"],
                        params["b2"], params["mlp2_w"], params["mlp2_b"])
    return jax.nn.sigmoid((out_z * out_y).reshape(-1))


# ------------------------------------ main ------------------------------------

def _uinit(key, shape, fan_in):
    bound = 1.0 / float(fan_in) ** 0.5
    return jax.random.uniform(key, shape, jnp.float32, -bound, bound)


if __name__ == "__main__":
    key = jax.random.PRNGKey(0)
    ks = jax.random.split(key, 10)

    _, _, L3z = _branch_lens(GRAPH_OUT_CHS + EMB_SIZE)
    _, _, L3y = _branch_lens(GRAPH_OUT_CHS)
    mlp1_in = C2_OUT * L3z
    mlp2_in = C2_OUT * L3y
    assert mlp1_in == 1200  # matches the module's hard-coded Linear(1200, 1)

    params = {
        "w1": _uinit(ks[0], (C1_OUT, MAX_NODES, C1_K), MAX_NODES * C1_K),
        "b1": _uinit(ks[1], (C1_OUT,), MAX_NODES * C1_K),
        "w2": _uinit(ks[2], (C2_OUT, C1_OUT, C2_K), C1_OUT * C2_K),
        "b2": _uinit(ks[3], (C2_OUT,), C1_OUT * C2_K),
        "mlp1_w": _uinit(ks[4], (1, mlp1_in), mlp1_in),
        "mlp1_b": _uinit(ks[5], (1,), mlp1_in),
        "mlp2_w": _uinit(ks[6], (1, mlp2_in), mlp2_in),
        "mlp2_b": _uinit(ks[7], (1,), mlp2_in),
    }

    num_nodes = BATCH * MAX_NODES
    h = 0.1 * jax.random.normal(ks[8], (num_nodes, GRAPH_OUT_CHS), jnp.float32)
    x = 0.1 * jax.random.normal(ks[9], (num_nodes, EMB_SIZE), jnp.float32)

    prep = prepare_readout_params(params, BATCH)   # one-time, hoisted from the call path
    out = jax.block_until_ready(readout_forward(h, x, prep))
    ref = jax.block_until_ready(ref_forward(h, x, params))

    assert out.shape == (BATCH,), out.shape
    if not jnp.allclose(out, ref, rtol=1e-3, atol=1e-3):
        raise AssertionError(f"mismatch: pallas={out}, ref={ref}")
    print("KERNEL_OK")
</pallas_src>

<mosaic_0001>
module attributes {stable_mosaic.version = 11 : i64} {
  func.func @_readout_branch_kernel(%arg0: i32, %arg1: memref<1x48x300xf32, #tpu.memory_space<vmem>>, %arg2: memref<128x48xf32, #tpu.memory_space<vmem>>, %arg3: memref<128x1xf32, #tpu.memory_space<vmem>>, %arg4: memref<64x128xf32, #tpu.memory_space<vmem>>, %arg5: memref<32x1xf32, #tpu.memory_space<vmem>>, %arg6: memref<1x32x75xf32, #tpu.memory_space<vmem>>, %arg7: memref<1x1x1xf32, #tpu.memory_space<vmem>>, %arg8: memref<1x1x75xf32, #tpu.memory_space<vmem>>, %arg9: memref<1x1x2xf32, #tpu.memory_space<vmem>>) attributes {dimension_semantics = [#tpu.dimension_semantics<parallel>], iteration_bounds = array<i64: 2>, scalar_prefetch = 0 : i64, scratch_operands = 0 : i64, tpu.core_type = #tpu.core_type<tc>, window_params = [{transform_indices = @transform_0, window_bounds = array<i64: 1, 48, 300>}, {pipeline_mode = #tpu.pipeline_mode<synchronous>, transform_indices = @transform_1, window_bounds = array<i64: 128, 48>}, {pipeline_mode = #tpu.pipeline_mode<synchronous>, transform_indices = @transform_2, window_bounds = array<i64: 128, 1>}, {pipeline_mode = #tpu.pipeline_mode<synchronous>, transform_indices = @transform_3, window_bounds = array<i64: 64, 128>}, {pipeline_mode = #tpu.pipeline_mode<synchronous>, transform_indices = @transform_4, window_bounds = array<i64: 32, 1>}, {transform_indices = @transform_5, window_bounds = array<i64: 1, 32, 75>}, {transform_indices = @transform_6, window_bounds = array<i64: 1, 1, 1>}, {transform_indices = @transform_7, window_bounds = array<i64: 1, 1, 75>}, {transform_indices = @transform_8, window_bounds = array<i64: 1, 1, 2>}]} {
    %c0 = arith.constant 0 : index
    %c0_0 = arith.constant 0 : index
    %0 = vector.load %arg2[%c0, %c0_0] : memref<128x48xf32, #tpu.memory_space<vmem>>, vector<128x48xf32>
    %c0_1 = arith.constant 0 : index
    %c0_2 = arith.constant 0 : index
    %c0_3 = arith.constant 0 : index
    %1 = vector.load %arg1[%c0_1, %c0_2, %c0_3] : memref<1x48x300xf32, #tpu.memory_space<vmem>>, vector<1x48x300xf32>
    %2 = vector.shape_cast %1 : vector<1x48x300xf32> to vector<48x300xf32>
    %cst = arith.constant dense<0.000000e+00> : vector<128x300xf32>
    %3 = tpu.matmul %0, %2, %cst {dimension_numbers = #tpu.dot_dimension_numbers<[1], [0], [0], [1], [0, 0, 1, 1], [], []>} : vector<128x48xf32>, vector<48x300xf32>, vector<128x300xf32> -> vector<128x300xf32>
    %c0_4 = arith.constant 0 : index
    %c0_5 = arith.constant 0 : index
    %4 = vector.load %arg3[%c0_4, %c0_5] : memref<128x1xf32, #tpu.memory_space<vmem>>, vector<128x1xf32>
    %5 = vector.broadcast %4 : vector<128x1xf32> to vector<128x300xf32>
    %6 = arith.addf %3, %5 : vector<128x300xf32>
    %cst_6 = arith.constant 0.000000e+00 : f32
    %7 = vector.broadcast %cst_6 : f32 to vector<128x300xf32>
    %8 = arith.maximumf %6, %7 : vector<128x300xf32>
    %9 = vector.extract_strided_slice %8 {offsets = [0, 0], sizes = [128, 75], strides = [1, 1]} : vector<128x300xf32> to vector<128x75xf32>
    %10 = vector.extract_strided_slice %8 {offsets = [0, 75], sizes = [128, 75], strides = [1, 1]} : vector<128x300xf32> to vector<128x75xf32>
    %11 = vector.extract_strided_slice %8 {offsets = [0, 150], sizes = [128, 75], strides = [1, 1]} : vector<128x300xf32> to vector<128x75xf32>
    %12 = vector.extract_strided_slice %8 {offsets = [0, 225], sizes = [128, 75], strides = [1, 1]} : vector<128x300xf32> to vector<128x75xf32>
    %13 = arith.maximumf %9, %10 : vector<128x75xf32>
    %14 = arith.maximumf %13, %11 : vector<128x75xf32>
    %cst_7 = arith.constant 0.000000e+00 : f32
    %15 = vector.broadcast %cst_7 : f32 to vector<128x1xf32>
    %16 = vector.extract_strided_slice %9 {offsets = [0, 1], sizes = [128, 74], strides = [1, 1]} : vector<128x75xf32> to vector<128x74xf32>
    %17 = tpu.concatenate %16, %15 in 1 : vector<128x74xf32>, vector<128x1xf32> -> vector<128x75xf32>
    %18 = arith.maximumf %11, %12 : vector<128x75xf32>
    %19 = arith.maximumf %18, %17 : vector<128x75xf32>
    %c0_8 = arith.constant 0 : index
    %c0_9 = arith.constant 0 : index
    %c0_10 = arith.constant 0 : index
    %20 = vector.load %arg8[%c0_8, %c0_9, %c0_10] : memref<1x1x75xf32, #tpu.memory_space<vmem>>, vector<1x1x75xf32>
    %21 = vector.shape_cast %20 : vector<1x1x75xf32> to vector<1x75xf32>
    %22 = vector.broadcast %21 : vector<1x75xf32> to vector<128x75xf32>
    %23 = arith.mulf %19, %22 : vector<128x75xf32>
    %c0_11 = arith.constant 0 : index
    %c0_12 = arith.constant 0 : index
    %24 = vector.load %arg4[%c0_11, %c0_12] : memref<64x128xf32, #tpu.memory_space<vmem>>, vector<64x128xf32>
    %cst_13 = arith.constant dense<0.000000e+00> : vector<64x75xf32>
    %25 = tpu.matmul %24, %14, %cst_13 {dimension_numbers = #tpu.dot_dimension_numbers<[1], [0], [0], [1], [0, 0, 1, 1], [], []>} : vector<64x128xf32>, vector<128x75xf32>, vector<64x75xf32> -> vector<64x75xf32>
    %c0_14 = arith.constant 0 : index
    %c0_15 = arith.constant 0 : index
    %26 = vector.load %arg4[%c0_14, %c0_15] : memref<64x128xf32, #tpu.memory_space<vmem>>, vector<64x128xf32>
    %cst_16 = arith.constant dense<0.000000e+00> : vector<64x75xf32>
    %27 = tpu.matmul %26, %23, %cst_16 {dimension_numbers = #tpu.dot_dimension_numbers<[1], [0], [0], [1], [0, 0, 1, 1], [], []>} : vector<64x128xf32>, vector<128x75xf32>, vector<64x75xf32> -> vector<64x75xf32>
    %28 = vector.extract_strided_slice %25 {offsets = [0, 0], sizes = [32, 75], strides = [1, 1]} : vector<64x75xf32> to vector<32x75xf32>
    %29 = vector.extract_strided_slice %25 {offsets = [32, 0], sizes = [32, 75], strides = [1, 1]} : vector<64x75xf32> to vector<32x75xf32>
    %30 = vector.extract_strided_slice %27 {offsets = [0, 0], sizes = [32, 75], strides = [1, 1]} : vector<64x75xf32> to vector<32x75xf32>
    %31 = vector.extract_strided_slice %27 {offsets = [32, 0], sizes = [32, 75], strides = [1, 1]} : vector<64x75xf32> to vector<32x75xf32>
    %cst_17 = arith.constant 0.000000e+00 : f32
    %32 = vector.broadcast %cst_17 : f32 to vector<32x1xf32>
    %33 = vector.extract_strided_slice %30 {offsets = [0, 0], sizes = [32, 74], strides = [1, 1]} : vector<32x75xf32> to vector<32x74xf32>
    %34 = tpu.concatenate %32, %33 in 1 : vector<32x1xf32>, vector<32x74xf32> -> vector<32x75xf32>
    %35 = arith.addf %29, %34 : vector<32x75xf32>
    %36 = arith.addf %28, %31 : vector<32x75xf32>
    %c0_18 = arith.constant 0 : index
    %c0_19 = arith.constant 0 : index
    %37 = vector.load %arg5[%c0_18, %c0_19] : memref<32x1xf32, #tpu.memory_space<vmem>>, vector<32x1xf32>
    %38 = vector.broadcast %37 : vector<32x1xf32> to vector<32x75xf32>
    %39 = arith.addf %35, %38 : vector<32x75xf32>
    %cst_20 = arith.constant 0.000000e+00 : f32
    %40 = vector.broadcast %cst_20 : f32 to vector<32x75xf32>
    %41 = arith.maximumf %39, %40 : vector<32x75xf32>
    %42 = vector.broadcast %37 : vector<32x1xf32> to vector<32x75xf32>
    %43 = arith.addf %36, %42 : vector<32x75xf32>
    %cst_21 = arith.constant 0.000000e+00 : f32
    %44 = vector.broadcast %cst_21 : f32 to vector<32x75xf32>
    %45 = arith.maximumf %43, %44 : vector<32x75xf32>
    %46 = arith.maximumf %41, %45 : vector<32x75xf32>
    %c0_22 = arith.constant 0 : index
    %c0_23 = arith.constant 0 : index
    %c0_24 = arith.constant 0 : index
    %47 = vector.load %arg6[%c0_22, %c0_23, %c0_24] : memref<1x32x75xf32, #tpu.memory_space<vmem>>, vector<1x32x75xf32>
    %48 = vector.shape_cast %47 : vector<1x32x75xf32> to vector<32x75xf32>
    %49 = arith.mulf %46, %48 : vector<32x75xf32>
    %cst_25 = arith.constant dense<0.000000e+00> : vector<32xf32>
    %50 = vector.multi_reduction <add>, %49, %cst_25 [1] : vector<32x75xf32> to vector<32xf32>
    %51 = vector.shape_cast %50 : vector<32xf32> to vector<32x1xf32>
    %52 = vector.extract_strided_slice %51 {offsets = [0, 0], sizes = [16, 1], strides = [1, 1]} : vector<32x1xf32> to vector<16x1xf32>
    %cst_26 = arith.constant dense<0.000000e+00> : vector<1xf32>
    %53 = vector.multi_reduction <add>, %52, %cst_26 [0] : vector<16x1xf32> to vector<1xf32>
    %54 = vector.shape_cast %53 : vector<1xf32> to vector<1x1xf32>
    %c0_27 = arith.constant 0 : index
    %c0_28 = arith.constant 0 : index
    %c0_29 = arith.constant 0 : index
    %55 = vector.load %arg7[%c0_27, %c0_28, %c0_29] : memref<1x1x1xf32, #tpu.memory_space<vmem>>, vector<1x1x1xf32>
    %56 = vector.shape_cast %55 : vector<1x1x1xf32> to vector<1x1xf32>
    %57 = arith.addf %54, %56 : vector<1x1xf32>
    %58 = vector.extract_strided_slice %51 {offsets = [16, 0], sizes = [16, 1], strides = [1, 1]} : vector<32x1xf32> to vector<16x1xf32>
    %cst_30 = arith.constant dense<0.000000e+00> : vector<1xf32>
    %59 = vector.multi_reduction <add>, %58, %cst_30 [0] : vector<16x1xf32> to vector<1xf32>
    %60 = vector.shape_cast %59 : vector<1xf32> to vector<1x1xf32>
    %c0_31 = arith.constant 0 : index
    %c0_32 = arith.constant 0 : index
    %c0_33 = arith.constant 0 : index
    %61 = vector.load %arg7[%c0_31, %c0_32, %c0_33] : memref<1x1x1xf32, #tpu.memory_space<vmem>>, vector<1x1x1xf32>
    %62 = vector.shape_cast %61 : vector<1x1x1xf32> to vector<1x1xf32>
    %63 = arith.addf %60, %62 : vector<1x1xf32>
    %64 = tpu.concatenate %57, %63 in 1 : vector<1x1xf32>, vector<1x1xf32> -> vector<1x2xf32>
    %c0_34 = arith.constant 0 : index
    %c0_35 = arith.constant 0 : index
    %c0_36 = arith.constant 0 : index
    %65 = vector.load %arg9[%c0_34, %c0_35, %c0_36] : memref<1x1x2xf32, #tpu.memory_space<vmem>>, vector<1x1x2xf32>
    %66 = vector.shape_cast %65 : vector<1x1x2xf32> to vector<1x2xf32>
    %67 = vector.shape_cast %64 : vector<1x2xf32> to vector<1x1x2xf32>
    tpu.vector_store %arg9[%c0_34, %c0_35, %c0_36], %67 {strides = array<i32>} : memref<1x1x2xf32, #tpu.memory_space<vmem>>, vector<1x1x2xf32>,
    return
  }
  func.func @transform_0(%arg0: i32) -> (i32, i32, i32) {
    %c0_i32 = arith.constant 0 : i32
    %c0_i32_0 = arith.constant 0 : i32
    %c0_i32_1 = arith.constant 0 : i32
    return %arg0, %c0_i32, %c0_i32_0 : i32, i32, i32
  }
  func.func @transform_1(%arg0: i32) -> (i32, i32) {
    %c0_i32 = arith.constant 0 : i32
    %c0_i32_0 = arith.constant 0 : i32
    %c0_i32_1 = arith.constant 0 : i32
    return %c0_i32, %c0_i32_0 : i32, i32
  }
  func.func @transform_2(%arg0: i32) -> (i32, i32) {
    %c0_i32 = arith.constant 0 : i32
    %c0_i32_0 = arith.constant 0 : i32
    %c0_i32_1 = arith.constant 0 : i32
    return %c0_i32, %c0_i32_0 : i32, i32
  }
  func.func @transform_3(%arg0: i32) -> (i32, i32) {
    %c0_i32 = arith.constant 0 : i32
    %c0_i32_0 = arith.constant 0 : i32
    %c0_i32_1 = arith.constant 0 : i32
    return %c0_i32, %c0_i32_0 : i32, i32
  }
  func.func @transform_4(%arg0: i32) -> (i32, i32) {
    %c0_i32 = arith.constant 0 : i32
    %c0_i32_0 = arith.constant 0 : i32
    %c0_i32_1 = arith.constant 0 : i32
    return %c0_i32, %c0_i32_0 : i32, i32
  }
  func.func @transform_5(%arg0: i32) -> (i32, i32, i32) {
    %c0_i32 = arith.constant 0 : i32
    %c0_i32_0 = arith.constant 0 : i32
    %c0_i32_1 = arith.constant 0 : i32
    return %arg0, %c0_i32, %c0_i32_0 : i32, i32, i32
  }
  func.func @transform_6(%arg0: i32) -> (i32, i32, i32) {
    %c0_i32 = arith.constant 0 : i32
    %c0_i32_0 = arith.constant 0 : i32
    %c0_i32_1 = arith.constant 0 : i32
    return %arg0, %c0_i32, %c0_i32_0 : i32, i32, i32
  }
  func.func @transform_7(%arg0: i32) -> (i32, i32, i32) {
    %c0_i32 = arith.constant 0 : i32
    %c0_i32_0 = arith.constant 0 : i32
    %c0_i32_1 = arith.constant 0 : i32
    return %arg0, %c0_i32, %c0_i32_0 : i32, i32, i32
  }
  func.func @transform_8(%arg0: i32) -> (i32, i32, i32) {
    %c0_i32 = arith.constant 0 : i32
    %c0_i32_0 = arith.constant 0 : i32
    %c0_i32_1 = arith.constant 0 : i32
    return %arg0, %c0_i32, %c0_i32_0 : i32, i32, i32
  }
}

</mosaic_0001>

<llo_original>
// kernel: _readout_forward.1
$region0: #{_readout_forward.1}
  #allocation0 [shape = 'u32[]', space=smem, size = 0x4, offset = 0x4, fixed_abs, tag = 'smem constant byte address 0x4 - core index']
  #allocation1 [shape = 'u32[144,128]{1,0:T(1,128)}', space=vmem, size = 0x12000, scoped, tag = 'internal scratch']
  %s0 = inlined_call_operand.vmem [shape: f32[2,48,300], index: 0, kind: input, shape index: {}]
  %s1 = inlined_call_operand.vmem [shape: f32[128,48], index: 1, kind: input, shape index: {}]
  %s2 = inlined_call_operand.vmem [shape: f32[128,1], index: 2, kind: input, shape index: {}]
  %s3 = inlined_call_operand.vmem [shape: f32[64,128], index: 3, kind: input, shape index: {}]
  %s4 = inlined_call_operand.vmem [shape: f32[32,1], index: 4, kind: input, shape index: {}]
  %s5 = inlined_call_operand.vmem [shape: f32[2,32,75], index: 5, kind: input, shape index: {}]
  %s6 = inlined_call_operand.vmem [shape: f32[2,1,1], index: 6, kind: input, shape index: {}]
  %s7 = inlined_call_operand.vmem [shape: f32[2,1,75], index: 7, kind: input, shape index: {}]
  %s8 = inlined_call_operand.vmem [shape: f32[2,1,2], index: 8, kind: output, shape index: {}]
  %s9 = sld [smem:[#allocation0]]
  $region65: #{_readout_forward.1} parent=0
    _
  %s11 = ssub.s32 1, %s9
  %s12 = scalar_select 0, %s11, %s9
  loop: start=0, step=1, limit=4
  $region2: #{_readout_forward.1} parent=0 // loop_pre_header
    _
  $region3: #{_readout_forward.1} parent=0 // loop_header
    %s14 = sphi 0, %s18
    %p15 = scmp.ge.s32.totalorder %s14, 4
    %s24 = sphi 0, %s26
    %s27 = sphi 0, %s24
    %s28 = sphi 0, %s27
    %s44 = sphi 0, %s28
    %s48 = sphi 0, %s48
    %s50 = sphi 0, %s48
    %s51 = sphi 0, %s50
    %s65 = sphi 0, %s51
    %s69 = sphi 0, %s69
    %s71 = sphi 0, %s69
    %s72 = sphi 0, %s71
    %s86 = sphi 0, %s72
    %s90 = sphi 0, %s90
    %s92 = sphi 0, %s90
    %s93 = sphi 0, %s92
    %s107 = sphi 0, %s93
    %s111 = sphi 0, %s111
    %s113 = sphi 0, %s111
    %s114 = sphi 0, %s113
    %s128 = sphi 0, %s114
    %s134 = sphi 0, %s136
    %s137 = sphi 0, %s134
    %s138 = sphi 0, %s137
    %s154 = sphi 0, %s138
    %s160 = sphi 0, %s162
    %s163 = sphi 0, %s160
    %s164 = sphi 0, %s163
    %s180 = sphi 0, %s164
    %s186 = sphi 0, %s188
    %s189 = sphi 0, %s186
    %s190 = sphi 0, %s189
    %s206 = sphi 0, %s190
    %s212 = sphi 0, %s214
    %s215 = sphi 0, %s212
    %s216 = sphi 0, %s215
    %s232 = sphi 0, %s216
  $region4: #{_readout_forward.1} parent=0 // loop_header_branch
    %17 = sbr.rel (%p15) target = $region8
  $region5: #{_readout_forward.1} parent=0 // loop_body
    %s19 = ssub.s32 %s14, 1
    %s20 = ssub.s32 %s14, 2
    %s21 = sadd.s32 %s14, 1
    %s22 = ssub.s32 %s14, %s21
    %p23 = scmp.eq.s32.totalorder %s22, 0
    %s25 = sadd.s32 %s24, 1
    %s26 = scalar_select %p23, %s24, %s25
    %p29 = pneg %p23
    %p30 = scmp.eq.s32.totalorder %s14, 1
    %p31 = por %p29, %p30
    %p32 = scmp.ne.s32.totalorder %s24, %s27
    %p33 = scmp.eq.s32.totalorder %s14, 0
    %p34 = por %p32, %p33
    %p35 = scmp.ne.s32.totalorder %s24, %s27
    %p36 = scmp.eq.s32.totalorder %s19, 1
    %p37 = por %p35, %p36
    %p38 = scmp.ne.s32.totalorder %s27, %s28
    %p39 = scmp.eq.s32.totalorder %s19, 0
    %p40 = por %p38, %p39
    %p41 = scmp.ne.s32.totalorder %s27, %s28
    %p42 = scmp.eq.s32.totalorder %s20, 1
    %p43 = por %p41, %p42
    %p45 = scmp.ne.s32.totalorder %s28, %s44
    %p46 = scmp.eq.s32.totalorder %s20, 0
    %p47 = por %p45, %p46
    %s49 = sadd.s32 %s48, 1
    %p52 = scmp.eq.s32.totalorder %s14, 1
    %p53 = scmp.ne.s32.totalorder %s48, %s50
    %p54 = scmp.eq.s32.totalorder %s14, 0
    %p55 = por %p53, %p54
    %p56 = scmp.ne.s32.totalorder %s48, %s50
    %p57 = scmp.eq.s32.totalorder %s19, 1
    %p58 = por %p56, %p57
    %p59 = scmp.ne.s32.totalorder %s50, %s51
    %p60 = scmp.eq.s32.totalorder %s19, 0
    %p61 = por %p59, %p60
    %p62 = scmp.ne.s32.totalorder %s50, %s51
    %p63 = scmp.eq.s32.totalorder %s20, 1
    %p64 = por %p62, %p63
    %p66 = scmp.ne.s32.totalorder %s51, %s65
    %p67 = scmp.eq.s32.totalorder %s20, 0
    %p68 = por %p66, %p67
    %s70 = sadd.s32 %s69, 1
    %p73 = scmp.eq.s32.totalorder %s14, 1
    %p74 = scmp.ne.s32.totalorder %s69, %s71
    %p75 = scmp.eq.s32.totalorder %s14, 0
    %p76 = por %p74, %p75
    %p77 = scmp.ne.s32.totalorder %s69, %s71
    %p78 = scmp.eq.s32.totalorder %s19, 1
    %p79 = por %p77, %p78
    %p80 = scmp.ne.s32.totalorder %s71, %s72
    %p81 = scmp.eq.s32.totalorder %s19, 0
    %p82 = por %p80, %p81
    %p83 = scmp.ne.s32.totalorder %s71, %s72
    %p84 = scmp.eq.s32.totalorder %s20, 1
    %p85 = por %p83, %p84
    %p87 = scmp.ne.s32.totalorder %s72, %s86
    %p88 = scmp.eq.s32.totalorder %s20, 0
    %p89 = por %p87, %p88
    %s91 = sadd.s32 %s90, 1
    %p94 = scmp.eq.s32.totalorder %s14, 1
    %p95 = scmp.ne.s32.totalorder %s90, %s92
    %p96 = scmp.eq.s32.totalorder %s14, 0
    %p97 = por %p95, %p96
    %p98 = scmp.ne.s32.totalorder %s90, %s92
    %p99 = scmp.eq.s32.totalorder %s19, 1
    %p100 = por %p98, %p99
    %p101 = scmp.ne.s32.totalorder %s92, %s93
    %p102 = scmp.eq.s32.totalorder %s19, 0
    %p103 = por %p101, %p102
    %p104 = scmp.ne.s32.totalorder %s92, %s93
    %p105 = scmp.eq.s32.totalorder %s20, 1
    %p106 = por %p104, %p105
    %p108 = scmp.ne.s32.totalorder %s93, %s107
    %p109 = scmp.eq.s32.totalorder %s20, 0
    %p110 = por %p108, %p109
    %s112 = sadd.s32 %s111, 1
    %p115 = scmp.eq.s32.totalorder %s14, 1
    %p116 = scmp.ne.s32.totalorder %s111, %s113
    %p117 = scmp.eq.s32.totalorder %s14, 0
    %p118 = por %p116, %p117
    %p119 = scmp.ne.s32.totalorder %s111, %s113
    %p120 = scmp.eq.s32.totalorder %s19, 1
    %p121 = por %p119, %p120
    %p122 = scmp.ne.s32.totalorder %s113, %s114
    %p123 = scmp.eq.s32.totalorder %s19, 0
    %p124 = por %p122, %p123
    %p125 = scmp.ne.s32.totalorder %s113, %s114
    %p126 = scmp.eq.s32.totalorder %s20, 1
    %p127 = por %p125, %p126
    %p129 = scmp.ne.s32.totalorder %s114, %s128
    %p130 = scmp.eq.s32.totalorder %s20, 0
    %p131 = por %p129, %p130
    %s132 = ssub.s32 %s14, %s21
    %p133 = scmp.eq.s32.totalorder %s132, 0
    %s135 = sadd.s32 %s134, 1
    %s136 = scalar_select %p133, %s134, %s135
    %p139 = pneg %p133
    %p140 = scmp.eq.s32.totalorder %s14, 1
    %p141 = por %p139, %p140
    %p142 = scmp.ne.s32.totalorder %s134, %s137
    %p143 = scmp.eq.s32.totalorder %s14, 0
    %p144 = por %p142, %p143
    %p145 = scmp.ne.s32.totalorder %s134, %s137
    %p146 = scmp.eq.s32.totalorder %s19, 1
    %p147 = por %p145, %p146
    %p148 = scmp.ne.s32.totalorder %s137, %s138
    %p149 = scmp.eq.s32.totalorder %s19, 0
    %p150 = por %p148, %p149
    %p151 = scmp.ne.s32.totalorder %s137, %s138
    %p152 = scmp.eq.s32.totalorder %s20, 1
    %p153 = por %p151, %p152
    %p155 = scmp.ne.s32.totalorder %s138, %s154
    %p156 = scmp.eq.s32.totalorder %s20, 0
    %p157 = por %p155, %p156
    %s158 = ssub.s32 %s14, %s21
    %p159 = scmp.eq.s32.totalorder %s158, 0
    %s161 = sadd.s32 %s160, 1
    %s162 = scalar_select %p159, %s160, %s161
    %p165 = pneg %p159
    %p166 = scmp.eq.s32.totalorder %s14, 1
    %p167 = por %p165, %p166
    %p168 = scmp.ne.s32.totalorder %s160, %s163
    %p169 = scmp.eq.s32.totalorder %s14, 0
    %p170 = por %p168, %p169
    %p171 = scmp.ne.s32.totalorder %s160, %s163
    %p172 = scmp.eq.s32.totalorder %s19, 1
    %p173 = por %p171, %p172
    %p174 = scmp.ne.s32.totalorder %s163, %s164
    %p175 = scmp.eq.s32.totalorder %s19, 0
    %p176 = por %p174, %p175
    %p177 = scmp.ne.s32.totalorder %s163, %s164
    %p178 = scmp.eq.s32.totalorder %s20, 1
    %p179 = por %p177, %p178
    %p181 = scmp.ne.s32.totalorder %s164, %s180
    %p182 = scmp.eq.s32.totalorder %s20, 0
    %p183 = por %p181, %p182
    %s184 = ssub.s32 %s14, %s21
    %p185 = scmp.eq.s32.totalorder %s184, 0
    %s187 = sadd.s32 %s186, 1
    %s188 = scalar_select %p185, %s186, %s187
    %p191 = pneg %p185
    %p192 = scmp.eq.s32.totalorder %s14, 1
    %p193 = por %p191, %p192
    %p194 = scmp.ne.s32.totalorder %s186, %s189
    %p195 = scmp.eq.s32.totalorder %s14, 0
    %p196 = por %p194, %p195
    %p197 = scmp.ne.s32.totalorder %s186, %s189
    %p198 = scmp.eq.s32.totalorder %s19, 1
    %p199 = por %p197, %p198
    %p200 = scmp.ne.s32.totalorder %s189, %s190
    %p201 = scmp.eq.s32.totalorder %s19, 0
    %p202 = por %p200, %p201
    %p203 = scmp.ne.s32.totalorder %s189, %s190
    %p204 = scmp.eq.s32.totalorder %s20, 1
    %p205 = por %p203, %p204
    %p207 = scmp.ne.s32.totalorder %s190, %s206
    %p208 = scmp.eq.s32.totalorder %s20, 0
    %p209 = por %p207, %p208
    %s210 = ssub.s32 %s14, %s21
    %p211 = scmp.eq.s32.totalorder %s210, 0
    %s213 = sadd.s32 %s212, 1
    %s214 = scalar_select %p211, %s212, %s213
    %p217 = pneg %p211
    %p218 = scmp.eq.s32.totalorder %s14, 1
    %p219 = por %p217, %p218
    %p220 = scmp.ne.s32.totalorder %s212, %s215
    %p221 = scmp.eq.s32.totalorder %s14, 0
    %p222 = por %p220, %p221
    %p223 = scmp.ne.s32.totalorder %s212, %s215
    %p224 = scmp.eq.s32.totalorder %s19, 1
    %p225 = por %p223, %p224
    %p226 = scmp.ne.s32.totalorder %s215, %s216
    %p227 = scmp.eq.s32.totalorder %s19, 0
    %p228 = por %p226, %p227
    %p229 = scmp.ne.s32.totalorder %s215, %s216
    %p230 = scmp.eq.s32.totalorder %s20, 1
    %p231 = por %p229, %p230
    %p233 = scmp.ne.s32.totalorder %s216, %s232
    %p234 = scmp.eq.s32.totalorder %s20, 0
    %p235 = por %p233, %p234
    %p236 = scmp.le.s32.totalorder 1, %s14
    %p237 = scmp.lt.s32.totalorder %s14, 3
    %p238 = pnand %p236, %p237
    %p239 = pneg %p238
    // Predicated region
    $region9: #{_readout_forward.1} parent=5 // pred_check
      _
    $region10: #{_readout_forward.1} parent=5 // pred_check_branch
      %241 = sbr.rel (%p238) target = $region12
    $region11: #{_readout_forward.1} parent=5 // pred_region
      %s242 = ssub.s32 %s14, 1
      // Predicated region
      $region13: #{_readout_forward.1} parent=11 // pred_check
        %p243 = pneg %p61
      $region14: #{_readout_forward.1} parent=11 // pred_check_branch
        %245 = sbr.rel (%p243) target = $region16
      $region15: #{_readout_forward.1} parent=11 // pred_region
        _
      $region16: #{_readout_forward.1} parent=11 // pred_fallthru
        _
      // Predicated region
      $region17: #{_readout_forward.1} parent=11 // pred_check
        %p246 = pneg %p82
      $region18: #{_readout_forward.1} parent=11 // pred_check_branch
        %248 = sbr.rel (%p246) target = $region20
      $region19: #{_readout_forward.1} parent=11 // pred_region
        _
      $region20: #{_readout_forward.1} parent=11 // pred_fallthru
        _
      // Predicated region
      $region21: #{_readout_forward.1} parent=11 // pred_check
        %p249 = pneg %p103
      $region22: #{_readout_forward.1} parent=11 // pred_check_branch
        %251 = sbr.rel (%p249) target = $region24
      $region23: #{_readout_forward.1} parent=11 // pred_region
        _
      $region24: #{_readout_forward.1} parent=11 // pred_fallthru
        _
      // Predicated region
      $region25: #{_readout_forward.1} parent=11 // pred_check
        %p252 = pneg %p124
      $region26: #{_readout_forward.1} parent=11 // pred_check_branch
        %254 = sbr.rel (%p252) target = $region28
      $region27: #{_readout_forward.1} parent=11 // pred_region
        _
      $region28: #{_readout_forward.1} parent=11 // pred_fallthru
        _
    $region12: #{_readout_forward.1} parent=5 // pred_fallthru
      _
    %p255 = scmp.lt.s32.totalorder %s14, 2
    // Predicated region
    $region29: #{_readout_forward.1} parent=5 // pred_check
      %p256 = pneg %p255
    $region30: #{_readout_forward.1} parent=5 // pred_check_branch
      %258 = sbr.rel (%p256) target = $region32
    $region31: #{_readout_forward.1} parent=5 // pred_region
      // Predicated region
      $region33: #{_readout_forward.1} parent=31 // pred_check
        %p259 = pneg %p34
      $region34: #{_readout_forward.1} parent=31 // pred_check_branch
        %261 = sbr.rel (%p259) target = $region36
      $region35: #{_readout_forward.1} parent=31 // pred_region
        %p262 = scmp.lt.s32.totalorder %s14, 1
        %s263 = scalar_select %p262, %s14, 1
        %s264 = smul.addr %s263, 18
        %s265 = smul.addr %s264, 8
        %s266 = scalar_lea.vmem %s0, %s265
      $region36: #{_readout_forward.1} parent=31 // pred_fallthru
        _
      // Predicated region
      $region37: #{_readout_forward.1} parent=31 // pred_check
        %p267 = pneg %p144
      $region38: #{_readout_forward.1} parent=31 // pred_check_branch
        %269 = sbr.rel (%p267) target = $region40
      $region39: #{_readout_forward.1} parent=31 // pred_region
        %p270 = scmp.lt.s32.totalorder %s14, 1
        %s271 = scalar_select %p270, %s14, 1
        %s272 = smul.addr %s271, 4
        %s273 = smul.addr %s272, 8
        %s274 = scalar_lea.vmem %s5, %s273
      $region40: #{_readout_forward.1} parent=31 // pred_fallthru
        _
      // Predicated region
      $region41: #{_readout_forward.1} parent=31 // pred_check
        %p275 = pneg %p170
      $region42: #{_readout_forward.1} parent=31 // pred_check_branch
        %277 = sbr.rel (%p275) target = $region44
      $region43: #{_readout_forward.1} parent=31 // pred_region
        %p278 = scmp.lt.s32.totalorder %s14, 1
        %s279 = scalar_select %p278, %s14, 1
        %s280 = scalar_lea.vmem %s6, %s279
      $region44: #{_readout_forward.1} parent=31 // pred_fallthru
        _
      // Predicated region
      $region45: #{_readout_forward.1} parent=31 // pred_check
        %p281 = pneg %p196
      $region46: #{_readout_forward.1} parent=31 // pred_check_branch
        %283 = sbr.rel (%p281) target = $region48
      $region47: #{_readout_forward.1} parent=31 // pred_region
        %p284 = scmp.lt.s32.totalorder %s14, 1
        %s285 = scalar_select %p284, %s14, 1
        %s286 = scalar_lea.vmem %s7, %s285
      $region48: #{_readout_forward.1} parent=31 // pred_fallthru
        _
    $region32: #{_readout_forward.1} parent=5 // pred_fallthru
      _
    %p287 = scmp.le.s32.totalorder 1, %s14
    %p288 = scmp.lt.s32.totalorder %s14, 3
    %p289 = pnand %p287, %p288
    %p290 = pneg %p289
    // Predicated region
    $region49: #{_readout_forward.1} parent=5 // pred_check
      _
    $region50: #{_readout_forward.1} parent=5 // pred_check_branch
      %292 = sbr.rel (%p289) target = $region52
    $region51: #{_readout_forward.1} parent=5 // pred_region
      %s293 = ssub.s32 %s14, 1
      %p294 = scmp.lt.s32.totalorder %s19, 1
      %s295 = scalar_select %p294, %s19, 1
      %s296 = smul.addr %s295, 18
      %s297 = smul.addr %s296, 8
      %s298 = scalar_lea.vmem %s0, %s297
      %p299 = pneg %p40
      %p300 = pneg %p37
      %p301 = pneg %p61
      %p302 = pneg %p58
      %p303 = pneg %p82
      %p304 = pneg %p79
      %p305 = pneg %p103
      %p306 = pneg %p100
      %p307 = pneg %p124
      %p308 = pneg %p121
      %p309 = scmp.lt.s32.totalorder %s19, 1
      %s310 = scalar_select %p309, %s19, 1
      %s311 = smul.addr %s310, 4
      %s312 = smul.addr %s311, 8
      %s313 = scalar_lea.vmem %s5, %s312
      %p314 = pneg %p150
      %p315 = pneg %p147
      %p316 = scmp.lt.s32.totalorder %s19, 1
      %s317 = scalar_select %p316, %s19, 1
      %s318 = scalar_lea.vmem %s6, %s317
      %p319 = pneg %p176
      %p320 = pneg %p173
      %p321 = scmp.lt.s32.totalorder %s19, 1
      %s322 = scalar_select %p321, %s19, 1
      %s323 = scalar_lea.vmem %s7, %s322
      %p324 = pneg %p202
      %p325 = pneg %p199
      %p326 = pneg %p228
      %p327 = pneg %p225
      %p328 = scmp.lt.s32.totalorder %s19, 1
      %s329 = scalar_select %p328, %s19, 1
      %s330 = scalar_lea.vmem %s8, %s329
      %p331 = scmp.lt.s32.totalorder %s19, 1
      %s332 = scalar_select %p331, %s19, 1
      %s333 = smul.addr %s332, 18
      %s334 = smul.addr %s333, 8
      %s335 = scalar_lea.vmem %s0, %s334
      %p336 = scmp.lt.s32.totalorder %s19, 1
      %s337 = scalar_select %p336, %s19, 1
      %s338 = smul.addr %s337, 4
      %s339 = smul.addr %s338, 8
      %s340 = scalar_lea.vmem %s5, %s339
      %p341 = scmp.lt.s32.totalorder %s19, 1
      %s342 = scalar_select %p341, %s19, 1
      %s343 = scalar_lea.vmem %s6, %s342
      %p344 = scmp.lt.s32.totalorder %s19, 1
      %s345 = scalar_select %p344, %s19, 1
      %s346 = scalar_lea.vmem %s7, %s345
      %p347 = scmp.lt.s32.totalorder %s19, 1
      %s348 = scalar_select %p347, %s19, 1
      %s349 = scalar_lea.vmem %s8, %s348
      %v350 = vld [vmem:[%s1] sm:$0xff]
      %v351 = vld [vmem:[%s1 + $0x8] sm:$0xff]
      %v352 = vld [vmem:[%s1 + $0x10] sm:$0xff]
      %v353 = vld [vmem:[%s1 + $0x18] sm:$0xff]
      %v354 = vld [vmem:[%s1 + $0x20] sm:$0xff]
      %v355 = vld [vmem:[%s1 + $0x28] sm:$0xff]
      %v356 = vld [vmem:[%s1 + $0x30] sm:$0xff]
      %v357 = vld [vmem:[%s1 + $0x38] sm:$0xff]
      %v358 = vld [vmem:[%s1 + $0x40] sm:$0xff]
      %v359 = vld [vmem:[%s1 + $0x48] sm:$0xff]
      %v360 = vld [vmem:[%s1 + $0x50] sm:$0xff]
      %v361 = vld [vmem:[%s1 + $0x58] sm:$0xff]
      %v362 = vld [vmem:[%s1 + $0x60] sm:$0xff]
      %v363 = vld [vmem:[%s1 + $0x68] sm:$0xff]
      %v364 = vld [vmem:[%s1 + $0x70] sm:$0xff]
      %v365 = vld [vmem:[%s1 + $0x78] sm:$0xff]
      %v366 = vld [vmem:[%s335] sm:$0xff]
      %v367 = vld [vmem:[%s335 + $0x8] sm:$0xff]
      %v368 = vld [vmem:[%s335 + $0x10] sm:$0xff]
      %v369 = vld [vmem:[%s335 + $0x18] sm:$0xff]
      %v370 = vld [vmem:[%s335 + $0x20] sm:$0xff]
      %v371 = vld [vmem:[%s335 + $0x28] sm:$0xff]
      %v372 = vld [vmem:[%s335 + $0x30] sm:$0xff]
      %v373 = vld [vmem:[%s335 + $0x38] sm:$0xff]
      %v374 = vld [vmem:[%s335 + $0x40] sm:$0xff]
      %v375 = vld [vmem:[%s335 + $0x48] sm:$0xff]
      %v376 = vld [vmem:[%s335 + $0x50] sm:$0xff]
      %v377 = vld [vmem:[%s335 + $0x58] sm:$0xff]
      %v378 = vld [vmem:[%s335 + $0x60] sm:$0xff]
      %v379 = vld [vmem:[%s335 + $0x68] sm:$0xff]
      %v380 = vld [vmem:[%s335 + $0x70] sm:$0xff]
      %v381 = vld [vmem:[%s335 + $0x78] sm:$0xff]
      %v382 = vld [vmem:[%s335 + $0x80] sm:$0xff]
      %v383 = vld [vmem:[%s335 + $0x88] sm:$0xff]
      %v384 = vld [vmem:[%s2] sm:$0xff]
      %v385 = vld [vmem:[%s2 + $0x8] sm:$0xff]
      %v386 = vld [vmem:[%s2 + $0x10] sm:$0xff]
      %v387 = vld [vmem:[%s2 + $0x18] sm:$0xff]
      %v388 = vld [vmem:[%s2 + $0x20] sm:$0xff]
      %v389 = vld [vmem:[%s2 + $0x28] sm:$0xff]
      %v390 = vld [vmem:[%s2 + $0x30] sm:$0xff]
      %v391 = vld [vmem:[%s2 + $0x38] sm:$0xff]
      %v392 = vld [vmem:[%s2 + $0x40] sm:$0xff]
      %v393 = vld [vmem:[%s2 + $0x48] sm:$0xff]
      %v394 = vld [vmem:[%s2 + $0x50] sm:$0xff]
      %v395 = vld [vmem:[%s2 + $0x58] sm:$0xff]
      %v396 = vld [vmem:[%s2 + $0x60] sm:$0xff]
      %v397 = vld [vmem:[%s2 + $0x68] sm:$0xff]
      %v398 = vld [vmem:[%s2 + $0x70] sm:$0xff]
      %v399 = vld [vmem:[%s2 + $0x78] sm:$0xff]
      %401 = vset.pattern.permute.xlu0 0
      %402 = vperm.xlu0 %401, %v384
      %v403 = vpop.permute.xlu0 %402
      %406 = vset.pattern.permute.xlu0 0
      %407 = vperm.xlu0 %406, %v385
      %v408 = vpop.permute.xlu0 %407
      %411 = vset.pattern.permute.xlu0 0
      %412 = vperm.xlu0 %411, %v386
      %v413 = vpop.permute.xlu0 %412
      %416 = vset.pattern.permute.xlu0 0
      %417 = vperm.xlu0 %416, %v387
      %v418 = vpop.permute.xlu0 %417
      %421 = vset.pattern.permute.xlu0 0
      %422 = vperm.xlu0 %421, %v388
      %v423 = vpop.permute.xlu0 %422
      %426 = vset.pattern.permute.xlu0 0
      %427 = vperm.xlu0 %426, %v389
      %v428 = vpop.permute.xlu0 %427
      %431 = vset.pattern.permute.xlu0 0
      %432 = vperm.xlu0 %431, %v390
      %v433 = vpop.permute.xlu0 %432
      %436 = vset.pattern.permute.xlu0 0
      %437 = vperm.xlu0 %436, %v391
      %v438 = vpop.permute.xlu0 %437
      %441 = vset.pattern.permute.xlu0 0
      %442 = vperm.xlu0 %441, %v392
      %v443 = vpop.permute.xlu0 %442
      %446 = vset.pattern.permute.xlu0 0
      %447 = vperm.xlu0 %446, %v393
      %v448 = vpop.permute.xlu0 %447
      %451 = vset.pattern.permute.xlu0 0
      %452 = vperm.xlu0 %451, %v394
      %v453 = vpop.permute.xlu0 %452
      %456 = vset.pattern.permute.xlu0 0
      %457 = vperm.xlu0 %456, %v395
      %v458 = vpop.permute.xlu0 %457
      %461 = vset.pattern.permute.xlu0 0
      %462 = vperm.xlu0 %461, %v396
      %v463 = vpop.permute.xlu0 %462
      %466 = vset.pattern.permute.xlu0 0
      %467 = vperm.xlu0 %466, %v397
      %v468 = vpop.permute.xlu0 %467
      %471 = vset.pattern.permute.xlu0 0
      %472 = vperm.xlu0 %471, %v398
      %v473 = vpop.permute.xlu0 %472
      %476 = vset.pattern.permute.xlu0 0
      %477 = vperm.xlu0 %476, %v399
      %v478 = vpop.permute.xlu0 %477
      %vm480 = vcmask 392192
      %v482 = vsel %vm480, %v350, 0
      %v485 = vsel %vm480, %v351, 0
      %v488 = vsel %vm480, %v352, 0
      %v491 = vsel %vm480, %v353, 0
      %v494 = vsel %vm480, %v354, 0
      %v497 = vsel %vm480, %v355, 0
      %v500 = vsel %vm480, %v356, 0
      %v503 = vsel %vm480, %v357, 0
      %v506 = vsel %vm480, %v358, 0
      %v509 = vsel %vm480, %v359, 0
      %v512 = vsel %vm480, %v360, 0
      %v515 = vsel %vm480, %v361, 0
      %v518 = vsel %vm480, %v362, 0
      %v521 = vsel %vm480, %v363, 0
      %v524 = vsel %vm480, %v364, 0
      %v527 = vsel %vm480, %v365, 0
      %529 = vmatprep.subr.mxu0 0.0
      %530 = vmatpush1.msra.mxu0 0.0
      %531 = vmatprep.subr.mxu0 0.0
      %532 = vmatpush1.msra.mxu0 0.0
      %533 = vmatprep.subr.mxu0 0.0
      %534 = vmatpush1.msra.mxu0 0.0
      %535 = vmatprep.subr.mxu0 0.0
      %536 = vmatpush1.msra.mxu0 0.0
      %537 = vmatprep.subr.mxu0 0.0
      %538 = vmatpush1.msra.mxu0 0.0
      %539 = vmatprep.subr.mxu0 0.0
      %540 = vmatpush1.msra.mxu0 0.0
      %541 = vmatprep.subr.mxu0 0.0
      %542 = vmatpush1.msra.mxu0 0.0
      %543 = vmatprep.subr.mxu0 0.0
      %544 = vmatpush1.msra.mxu0 0.0
      %545 = vmatprep.subr.mxu0 0.0
      %546 = vmatpush1.msra.mxu0 0.0
      %547 = vmatprep.subr.mxu0 0.0
      %548 = vmatpush1.msra.mxu0 0.0
      %549 = vmatprep.subr.mxu0 %v382
      %550 = vmatpush1.msra.mxu0 %v381
      %551 = vmatprep.subr.mxu0 %v379
      %552 = vmatpush1.msra.mxu0 %v378
      %553 = vmatprep.subr.mxu0 %v376
      %554 = vmatpush1.msra.mxu0 %v375
      %555 = vmatprep.subr.mxu0 %v373
      %556 = vmatpush1.msra.mxu0 %v372
      %557 = vmatprep.subr.mxu0 %v370
      %558 = vmatpush1.msra.mxu0 %v369
      %559 = vmatprep.subr.mxu0 %v367
      %560 = vmatpush1.msra.mxu0 %v366
      %561 = vmatprep.subr.mxu0 0.0
      %562 = vmatpush2.msra.mxu0 0.0
      %563 = vmatprep.subr.mxu0 0.0
      %564 = vmatpush2.msra.mxu0 0.0
      %565 = vmatprep.subr.mxu0 0.0
      %566 = vmatpush2.msra.mxu0 0.0
      %567 = vmatprep.subr.mxu0 0.0
      %568 = vmatpush2.msra.mxu0 0.0
      %569 = vmatprep.subr.mxu0 0.0
      %570 = vmatpush2.msra.mxu0 0.0
      %571 = vmatprep.subr.mxu0 0.0
      %572 = vmatpush2.msra.mxu0 0.0
      %573 = vmatprep.subr.mxu0 0.0
      %574 = vmatpush2.msra.mxu0 0.0
      %575 = vmatprep.subr.mxu0 0.0
      %576 = vmatpush2.msra.mxu0 0.0
      %577 = vmatprep.subr.mxu0 0.0
      %578 = vmatpush2.msra.mxu0 0.0
      %579 = vmatprep.subr.mxu0 0.0
      %580 = vmatpush2.msra.mxu0 0.0
      %581 = vmatprep.subr.mxu0 0.0
      %582 = vmatpush2.msra.mxu0 0.0
      %583 = vmatprep.subr.mxu0 0.0
      %584 = vmatpush2.msra.mxu0 0.0
      %585 = vmatprep.subr.mxu0 0.0
      %586 = vmatpush2.msra.mxu0 0.0
      %587 = vmatprep.subr.mxu0 0.0
      %588 = vmatpush2.msra.mxu0 0.0
      %589 = vmatprep.subr.mxu0 0.0
      %590 = vmatpush2.msra.mxu0 0.0
      %591 = vmatprep.subr.mxu0 0.0
      %592 = vmatpush2.msra.mxu0 0.0
      %593 = vmatprep.mubr.f32.mxu0 0.0
      %594 = vmatmul.mubr.f32.gmra.mxu0 %v482
      %v595 = vpop.f32.mrf.mxu0
      %v596 = vadd.f32 %v403, %v595
      %v597 = vpop.f32.mrf.mxu0
      %v598 = vadd.f32 %v403, %v597
      %599 = vmatprep.mubr.f32.mxu0 0.0
      %600 = vmatmul.mubr.f32.gmra.mxu0 %v485
      %v601 = vpop.f32.mrf.mxu0
      %v602 = vadd.f32 %v408, %v601
      %v603 = vpop.f32.mrf.mxu0
      %v604 = vadd.f32 %v408, %v603
      %605 = vmatprep.mubr.f32.mxu0 0.0
      %606 = vmatmul.mubr.f32.gmra.mxu0 %v488
      %v607 = vpop.f32.mrf.mxu0
      %v608 = vadd.f32 %v413, %v607
      %v609 = vpop.f32.mrf.mxu0
      %v610 = vadd.f32 %v413, %v609
      %611 = vmatprep.mubr.f32.mxu0 0.0
      %612 = vmatmul.mubr.f32.gmra.mxu0 %v491
      %v613 = vpop.f32.mrf.mxu0
      %v614 = vadd.f32 %v418, %v613
      %v615 = vpop.f32.mrf.mxu0
      %v616 = vadd.f32 %v418, %v615
      %617 = vmatprep.mubr.f32.mxu0 0.0
      %618 = vmatmul.mubr.f32.gmra.mxu0 %v494
      %v619 = vpop.f32.mrf.mxu0
      %v620 = vadd.f32 %v423, %v619
      %v621 = vpop.f32.mrf.mxu0
      %v622 = vadd.f32 %v423, %v621
      %623 = vmatprep.mubr.f32.mxu0 0.0
      %624 = vmatmul.mubr.f32.gmra.mxu0 %v497
      %v625 = vpop.f32.mrf.mxu0
      %v626 = vadd.f32 %v428, %v625
      %v627 = vpop.f32.mrf.mxu0
      %v628 = vadd.f32 %v428, %v627
      %629 = vmatprep.mubr.f32.mxu0 0.0
      %630 = vmatmul.mubr.f32.gmra.mxu0 %v500
      %v631 = vpop.f32.mrf.mxu0
      %v632 = vadd.f32 %v433, %v631
      %v633 = vpop.f32.mrf.mxu0
      %v634 = vadd.f32 %v433, %v633
      %635 = vmatprep.mubr.f32.mxu0 0.0
      %636 = vmatmul.mubr.f32.gmra.mxu0 %v503
      %v637 = vpop.f32.mrf.mxu0
      %v638 = vadd.f32 %v438, %v637
      %v639 = vpop.f32.mrf.mxu0
      %v640 = vadd.f32 %v438, %v639
      %641 = vmatprep.mubr.f32.mxu0 0.0
      %642 = vmatmul.mubr.f32.gmra.mxu0 %v506
      %v643 = vpop.f32.mrf.mxu0
      %v644 = vadd.f32 %v443, %v643
      %v645 = vpop.f32.mrf.mxu0
      %v646 = vadd.f32 %v443, %v645
      %647 = vmatprep.mubr.f32.mxu0 0.0
      %648 = vmatmul.mubr.f32.gmra.mxu0 %v509
      %v649 = vpop.f32.mrf.mxu0
      %v650 = vadd.f32 %v448, %v649
      %v651 = vpop.f32.mrf.mxu0
      %v652 = vadd.f32 %v448, %v651
      %653 = vmatprep.mubr.f32.mxu0 0.0
      %654 = vmatmul.mubr.f32.gmra.mxu0 %v512
      %v655 = vpop.f32.mrf.mxu0
      %v656 = vadd.f32 %v453, %v655
      %v657 = vpop.f32.mrf.mxu0
      %v658 = vadd.f32 %v453, %v657
      %659 = vmatprep.mubr.f32.mxu0 0.0
      %660 = vmatmul.mubr.f32.gmra.mxu0 %v515
      %v661 = vpop.f32.mrf.mxu0
      %v662 = vadd.f32 %v458, %v661
      %v663 = vpop.f32.mrf.mxu0
      %v664 = vadd.f32 %v458, %v663
      %665 = vmatprep.mubr.f32.mxu0 0.0
      %666 = vmatmul.mubr.f32.gmra.mxu0 %v518
      %v667 = vpop.f32.mrf.mxu0
      %v668 = vadd.f32 %v463, %v667
      %v669 = vpop.f32.mrf.mxu0
      %v670 = vadd.f32 %v463, %v669
      %671 = vmatprep.mubr.f32.mxu0 0.0
      %672 = vmatmul.mubr.f32.gmra.mxu0 %v521
      %v673 = vpop.f32.mrf.mxu0
      %v674 = vadd.f32 %v468, %v673
      %v675 = vpop.f32.mrf.mxu0
      %v676 = vadd.f32 %v468, %v675
      %677 = vmatprep.mubr.f32.mxu0 0.0
      %678 = vmatmul.mubr.f32.gmra.mxu0 %v524
      %v679 = vpop.f32.mrf.mxu0
      %v680 = vadd.f32 %v473, %v679
      %v681 = vpop.f32.mrf.mxu0
      %v682 = vadd.f32 %v473, %v681
      %683 = vmatprep.mubr.f32.mxu0 0.0
      %684 = vmatmul.mubr.f32.gmra.mxu0 %v527
      %v685 = vpop.f32.mrf.mxu0
      %v686 = vadd.f32 %v478, %v685
      %v687 = vpop.f32.mrf.mxu0
      %v688 = vadd.f32 %v478, %v687
      %689 = vdwg.mxu0
      %690 = vmatprep.subr.mxu0 0.0
      %691 = vmatpush1.msra.mxu0 0.0
      %692 = vmatprep.subr.mxu0 0.0
      %693 = vmatpush1.msra.mxu0 0.0
      %694 = vmatprep.subr.mxu0 0.0
      %695 = vmatpush1.msra.mxu0 0.0
      %696 = vmatprep.subr.mxu0 0.0
      %697 = vmatpush1.msra.mxu0 0.0
      %698 = vmatprep.subr.mxu0 0.0
      %699 = vmatpush1.msra.mxu0 0.0
      %700 = vmatprep.subr.mxu0 0.0
      %701 = vmatpush1.msra.mxu0 0.0
      %702 = vmatprep.subr.mxu0 0.0
      %703 = vmatpush1.msra.mxu0 0.0
      %704 = vmatprep.subr.mxu0 0.0
      %705 = vmatpush1.msra.mxu0 0.0
      %706 = vmatprep.subr.mxu0 0.0
      %707 = vmatpush1.msra.mxu0 0.0
      %708 = vmatprep.subr.mxu0 0.0
      %709 = vmatpush1.msra.mxu0 0.0
      %710 = vmatprep.subr.mxu0 0.0
      %711 = vmatpush1.msra.mxu0 %v383
      %712 = vmatprep.subr.mxu0 0.0
      %713 = vmatpush1.msra.mxu0 %v380
      %714 = vmatprep.subr.mxu0 0.0
      %715 = vmatpush1.msra.mxu0 %v377
      %716 = vmatprep.subr.mxu0 0.0
      %717 = vmatpush1.msra.mxu0 %v374
      %718 = vmatprep.subr.mxu0 0.0
      %719 = vmatpush1.msra.mxu0 %v371
      %720 = vmatprep.subr.mxu0 0.0
      %721 = vmatpush1.msra.mxu0 %v368
      %722 = vmatprep.subr.mxu0 0.0
      %723 = vmatpush2.msra.mxu0 0.0
      %724 = vmatprep.subr.mxu0 0.0
      %725 = vmatpush2.msra.mxu0 0.0
      %726 = vmatprep.subr.mxu0 0.0
      %727 = vmatpush2.msra.mxu0 0.0
      %728 = vmatprep.subr.mxu0 0.0
      %729 = vmatpush2.msra.mxu0 0.0
      %730 = vmatprep.subr.mxu0 0.0
      %731 = vmatpush2.msra.mxu0 0.0
      %732 = vmatprep.subr.mxu0 0.0
      %733 = vmatpush2.msra.mxu0 0.0
      %734 = vmatprep.subr.mxu0 0.0
      %735 = vmatpush2.msra.mxu0 0.0
      %736 = vmatprep.subr.mxu0 0.0
      %737 = vmatpush2.msra.mxu0 0.0
      %738 = vmatprep.subr.mxu0 0.0
      %739 = vmatpush2.msra.mxu0 0.0
      %740 = vmatprep.subr.mxu0 0.0
      %741 = vmatpush2.msra.mxu0 0.0
      %742 = vmatprep.subr.mxu0 0.0
      %743 = vmatpush2.msra.mxu0 0.0
      %744 = vmatprep.subr.mxu0 0.0
      %745 = vmatpush2.msra.mxu0 0.0
      %746 = vmatprep.subr.mxu0 0.0
      %747 = vmatpush2.msra.mxu0 0.0
      %748 = vmatprep.subr.mxu0 0.0
      %749 = vmatpush2.msra.mxu0 0.0
      %750 = vmatprep.subr.mxu0 0.0
      %751 = vmatpush2.msra.mxu0 0.0
      %752 = vmatprep.subr.mxu0 0.0
      %753 = vmatpush2.msra.mxu0 0.0
      %754 = vmatprep.mubr.f32.mxu0 0.0
      %755 = vmatmul.mubr.f32.gmra.mxu0 %v482
      %v756 = vpop.f32.mrf.mxu0
      %v757 = vadd.f32 %v403, %v756
      %v758 = vpop.f32.mrf.mxu0
      %759 = vmatprep.mubr.f32.mxu0 0.0
      %760 = vmatmul.mubr.f32.gmra.mxu0 %v485
      %v761 = vpop.f32.mrf.mxu0
      %v762 = vadd.f32 %v408, %v761
      %v763 = vpop.f32.mrf.mxu0
      %764 = vmatprep.mubr.f32.mxu0 0.0
      %765 = vmatmul.mubr.f32.gmra.mxu0 %v488
      %v766 = vpop.f32.mrf.mxu0
      %v767 = vadd.f32 %v413, %v766
      %v768 = vpop.f32.mrf.mxu0
      %769 = vmatprep.mubr.f32.mxu0 0.0
      %770 = vmatmul.mubr.f32.gmra.mxu0 %v491
      %v771 = vpop.f32.mrf.mxu0
      %v772 = vadd.f32 %v418, %v771
      %v773 = vpop.f32.mrf.mxu0
      %774 = vmatprep.mubr.f32.mxu0 0.0
      %775 = vmatmul.mubr.f32.gmra.mxu0 %v494
      %v776 = vpop.f32.mrf.mxu0
      %v777 = vadd.f32 %v423, %v776
      %v778 = vpop.f32.mrf.mxu0
      %779 = vmatprep.mubr.f32.mxu0 0.0
      %780 = vmatmul.mubr.f32.gmra.mxu0 %v497
      %v781 = vpop.f32.mrf.mxu0
      %v782 = vadd.f32 %v428, %v781
      %v783 = vpop.f32.mrf.mxu0
      %784 = vmatprep.mubr.f32.mxu0 0.0
      %785 = vmatmul.mubr.f32.gmra.mxu0 %v500
      %v786 = vpop.f32.mrf.mxu0
      %v787 = vadd.f32 %v433, %v786
      %v788 = vpop.f32.mrf.mxu0
      %789 = vmatprep.mubr.f32.mxu0 0.0
      %790 = vmatmul.mubr.f32.gmra.mxu0 %v503
      %v791 = vpop.f32.mrf.mxu0
      %v792 = vadd.f32 %v438, %v791
      %v793 = vpop.f32.mrf.mxu0
      %794 = vmatprep.mubr.f32.mxu0 0.0
      %795 = vmatmul.mubr.f32.gmra.mxu0 %v506
      %v796 = vpop.f32.mrf.mxu0
      %v797 = vadd.f32 %v443, %v796
      %v798 = vpop.f32.mrf.mxu0
      %799 = vmatprep.mubr.f32.mxu0 0.0
      %800 = vmatmul.mubr.f32.gmra.mxu0 %v509
      %v801 = vpop.f32.mrf.mxu0
      %v802 = vadd.f32 %v448, %v801
      %v803 = vpop.f32.mrf.mxu0
      %804 = vmatprep.mubr.f32.mxu0 0.0
      %805 = vmatmul.mubr.f32.gmra.mxu0 %v512
      %v806 = vpop.f32.mrf.mxu0
      %v807 = vadd.f32 %v453, %v806
      %v808 = vpop.f32.mrf.mxu0
      %809 = vmatprep.mubr.f32.mxu0 0.0
      %810 = vmatmul.mubr.f32.gmra.mxu0 %v515
      %v811 = vpop.f32.mrf.mxu0
      %v812 = vadd.f32 %v458, %v811
      %v813 = vpop.f32.mrf.mxu0
      %814 = vmatprep.mubr.f32.mxu0 0.0
      %815 = vmatmul.mubr.f32.gmra.mxu0 %v518
      %v816 = vpop.f32.mrf.mxu0
      %v817 = vadd.f32 %v463, %v816
      %v818 = vpop.f32.mrf.mxu0
      %819 = vmatprep.mubr.f32.mxu0 0.0
      %820 = vmatmul.mubr.f32.gmra.mxu0 %v521
      %v821 = vpop.f32.mrf.mxu0
      %v822 = vadd.f32 %v468, %v821
      %v823 = vpop.f32.mrf.mxu0
      %824 = vmatprep.mubr.f32.mxu0 0.0
      %825 = vmatmul.mubr.f32.gmra.mxu0 %v524
      %v826 = vpop.f32.mrf.mxu0
      %v827 = vadd.f32 %v473, %v826
      %v828 = vpop.f32.mrf.mxu0
      %829 = vmatprep.mubr.f32.mxu0 0.0
      %830 = vmatmul.mubr.f32.gmra.mxu0 %v527
      %v831 = vpop.f32.mrf.mxu0
      %v832 = vadd.f32 %v478, %v831
      %v833 = vpop.f32.mrf.mxu0
      %834 = vdwg.mxu0
      %v835 = vmax.f32 %v596, 0.0
      %v836 = vmax.f32 %v598, 0.0
      %v837 = vmax.f32 %v757, 0.0
      %v838 = vmax.f32 %v602, 0.0
      %v839 = vmax.f32 %v604, 0.0
      %v840 = vmax.f32 %v762, 0.0
      %v841 = vmax.f32 %v608, 0.0
      %v842 = vmax.f32 %v610, 0.0
      %v843 = vmax.f32 %v767, 0.0
      %v844 = vmax.f32 %v614, 0.0
      %v845 = vmax.f32 %v616, 0.0
      %v846 = vmax.f32 %v772, 0.0
      %v847 = vmax.f32 %v620, 0.0
      %v848 = vmax.f32 %v622, 0.0
      %v849 = vmax.f32 %v777, 0.0
      %v850 = vmax.f32 %v626, 0.0
      %v851 = vmax.f32 %v628, 0.0
      %v852 = vmax.f32 %v782, 0.0
      %v853 = vmax.f32 %v632, 0.0
      %v854 = vmax.f32 %v634, 0.0
      %v855 = vmax.f32 %v787, 0.0
      %v856 = vmax.f32 %v638, 0.0
      %v857 = vmax.f32 %v640, 0.0
      %v858 = vmax.f32 %v792, 0.0
      %v859 = vmax.f32 %v644, 0.0
      %v860 = vmax.f32 %v646, 0.0
      %v861 = vmax.f32 %v797, 0.0
      %v862 = vmax.f32 %v650, 0.0
      %v863 = vmax.f32 %v652, 0.0
      %v864 = vmax.f32 %v802, 0.0
      %v865 = vmax.f32 %v656, 0.0
      %v866 = vmax.f32 %v658, 0.0
      %v867 = vmax.f32 %v807, 0.0
      %v868 = vmax.f32 %v662, 0.0
      %v869 = vmax.f32 %v664, 0.0
      %v870 = vmax.f32 %v812, 0.0
      %v871 = vmax.f32 %v668, 0.0
      %v872 = vmax.f32 %v670, 0.0
      %v873 = vmax.f32 %v817, 0.0
      %v874 = vmax.f32 %v674, 0.0
      %v875 = vmax.f32 %v676, 0.0
      %v876 = vmax.f32 %v822, 0.0
      %v877 = vmax.f32 %v680, 0.0
      %v878 = vmax.f32 %v682, 0.0
      %v879 = vmax.f32 %v827, 0.0
      %v880 = vmax.f32 %v686, 0.0
      %v881 = vmax.f32 %v688, 0.0
      %v882 = vmax.f32 %v832, 0.0
      %915 = vrot.lane.b32.xlu0 %v835, 53
      %v916 = vpop.permute.xlu0 %915
      %917 = vrot.lane.b32.xlu0 %v836, 53
      %v918 = vpop.permute.xlu0 %917
      %919 = vrot.lane.b32.xlu0 %v838, 53
      %v920 = vpop.permute.xlu0 %919
      %921 = vrot.lane.b32.xlu0 %v839, 53
      %v922 = vpop.permute.xlu0 %921
      %923 = vrot.lane.b32.xlu0 %v841, 53
      %v924 = vpop.permute.xlu0 %923
      %925 = vrot.lane.b32.xlu0 %v842, 53
      %v926 = vpop.permute.xlu0 %925
      %927 = vrot.lane.b32.xlu0 %v844, 53
      %v928 = vpop.permute.xlu0 %927
      %929 = vrot.lane.b32.xlu0 %v845, 53
      %v930 = vpop.permute.xlu0 %929
      %931 = vrot.lane.b32.xlu0 %v847, 53
      %v932 = vpop.permute.xlu0 %931
      %933 = vrot.lane.b32.xlu0 %v848, 53
      %v934 = vpop.permute.xlu0 %933
      %935 = vrot.lane.b32.xlu0 %v850, 53
      %v936 = vpop.permute.xlu0 %935
      %937 = vrot.lane.b32.xlu0 %v851, 53
      %v938 = vpop.permute.xlu0 %937
      %939 = vrot.lane.b32.xlu0 %v853, 53
      %v940 = vpop.permute.xlu0 %939
      %941 = vrot.lane.b32.xlu0 %v854, 53
      %v942 = vpop.permute.xlu0 %941
      %943 = vrot.lane.b32.xlu0 %v856, 53
      %v944 = vpop.permute.xlu0 %943
      %945 = vrot.lane.b32.xlu0 %v857, 53
      %v946 = vpop.permute.xlu0 %945
      %947 = vrot.lane.b32.xlu0 %v859, 53
      %v948 = vpop.permute.xlu0 %947
      %949 = vrot.lane.b32.xlu0 %v860, 53
      %v950 = vpop.permute.xlu0 %949
      %951 = vrot.lane.b32.xlu0 %v862, 53
      %v952 = vpop.permute.xlu0 %951
      %953 = vrot.lane.b32.xlu0 %v863, 53
      %v954 = vpop.permute.xlu0 %953
      %955 = vrot.lane.b32.xlu0 %v865, 53
      %v956 = vpop.permute.xlu0 %955
      %957 = vrot.lane.b32.xlu0 %v866, 53
      %v958 = vpop.permute.xlu0 %957
      %959 = vrot.lane.b32.xlu0 %v868, 53
      %v960 = vpop.permute.xlu0 %959
      %961 = vrot.lane.b32.xlu0 %v869, 53
      %v962 = vpop.permute.xlu0 %961
      %963 = vrot.lane.b32.xlu0 %v871, 53
      %v964 = vpop.permute.xlu0 %963
      %965 = vrot.lane.b32.xlu0 %v872, 53
      %v966 = vpop.permute.xlu0 %965
      %967 = vrot.lane.b32.xlu0 %v874, 53
      %v968 = vpop.permute.xlu0 %967
      %969 = vrot.lane.b32.xlu0 %v875, 53
      %v970 = vpop.permute.xlu0 %969
      %971 = vrot.lane.b32.xlu0 %v877, 53
      %v972 = vpop.permute.xlu0 %971
      %973 = vrot.lane.b32.xlu0 %v878, 53
      %v974 = vpop.permute.xlu0 %973
      %975 = vrot.lane.b32.xlu0 %v880, 53
      %v976 = vpop.permute.xlu0 %975
      %977 = vrot.lane.b32.xlu0 %v881, 53
      %v978 = vpop.permute.xlu0 %977
      %vm979 = vcmask 433152
      %v980 = vsel %vm979, %v916, %v918
      %v981 = vsel %vm979, %v920, %v922
      %v982 = vsel %vm979, %v924, %v926
      %v983 = vsel %vm979, %v928, %v930
      %v984 = vsel %vm979, %v932, %v934
      %v985 = vsel %vm979, %v936, %v938
      %v986 = vsel %vm979, %v940, %v942
      %v987 = vsel %vm979, %v944, %v946
      %v988 = vsel %vm979, %v948, %v950
      %v989 = vsel %vm979, %v952, %v954
      %v990 = vsel %vm979, %v956, %v958
      %v991 = vsel %vm979, %v960, %v962
      %v992 = vsel %vm979, %v964, %v966
      %v993 = vsel %vm979, %v968, %v970
      %v994 = vsel %vm979, %v972, %v974
      %v995 = vsel %vm979, %v976, %v978
      %v1012 = vmax.f32 %v835, %v980
      %v1013 = vmax.f32 %v838, %v981
      %v1014 = vmax.f32 %v841, %v982
      %v1015 = vmax.f32 %v844, %v983
      %v1016 = vmax.f32 %v847, %v984
      %v1017 = vmax.f32 %v850, %v985
      %v1018 = vmax.f32 %v853, %v986
      %v1019 = vmax.f32 %v856, %v987
      %v1020 = vmax.f32 %v859, %v988
      %v1021 = vmax.f32 %v862, %v989
      %v1022 = vmax.f32 %v865, %v990
      %v1023 = vmax.f32 %v868, %v991
      %v1024 = vmax.f32 %v871, %v992
      %v1025 = vmax.f32 %v874, %v993
      %v1026 = vmax.f32 %v877, %v994
      %v1027 = vmax.f32 %v880, %v995
      %1028 = vrot.lane.b32.xlu0 %v836, 106
      %v1029 = vpop.permute.xlu0 %1028
      %1030 = vrot.lane.b32.xlu0 %v839, 106
      %v1031 = vpop.permute.xlu0 %1030
      %1032 = vrot.lane.b32.xlu0 %v842, 106
      %v1033 = vpop.permute.xlu0 %1032
      %1034 = vrot.lane.b32.xlu0 %v845, 106
      %v1035 = vpop.permute.xlu0 %1034
      %1036 = vrot.lane.b32.xlu0 %v848, 106
      %v1037 = vpop.permute.xlu0 %1036
      %1038 = vrot.lane.b32.xlu0 %v851, 106
      %v1039 = vpop.permute.xlu0 %1038
      %1040 = vrot.lane.b32.xlu0 %v854, 106
      %v1041 = vpop.permute.xlu0 %1040
      %1042 = vrot.lane.b32.xlu0 %v857, 106
      %v1043 = vpop.permute.xlu0 %1042
      %1044 = vrot.lane.b32.xlu0 %v860, 106
      %v1045 = vpop.permute.xlu0 %1044
      %1046 = vrot.lane.b32.xlu0 %v863, 106
      %v1047 = vpop.permute.xlu0 %1046
      %1048 = vrot.lane.b32.xlu0 %v866, 106
      %v1049 = vpop.permute.xlu0 %1048
      %1050 = vrot.lane.b32.xlu0 %v869, 106
      %v1051 = vpop.permute.xlu0 %1050
      %1052 = vrot.lane.b32.xlu0 %v872, 106
      %v1053 = vpop.permute.xlu0 %1052
      %1054 = vrot.lane.b32.xlu0 %v875, 106
      %v1055 = vpop.permute.xlu0 %1054
      %1056 = vrot.lane.b32.xlu0 %v878, 106
      %v1057 = vpop.permute.xlu0 %1056
      %1058 = vrot.lane.b32.xlu0 %v881, 106
      %v1059 = vpop.permute.xlu0 %1058
      %v1076 = vmax.f32 %v1012, %v1029
      %v1077 = vmax.f32 %v1013, %v1031
      %v1078 = vmax.f32 %v1014, %v1033
      %v1079 = vmax.f32 %v1015, %v1035
      %v1080 = vmax.f32 %v1016, %v1037
      %v1081 = vmax.f32 %v1017, %v1039
      %v1082 = vmax.f32 %v1018, %v1041
      %v1083 = vmax.f32 %v1019, %v1043
      %v1084 = vmax.f32 %v1020, %v1045
      %v1085 = vmax.f32 %v1021, %v1047
      %v1086 = vmax.f32 %v1022, %v1049
      %v1087 = vmax.f32 %v1023, %v1051
      %v1088 = vmax.f32 %v1024, %v1053
      %v1089 = vmax.f32 %v1025, %v1055
      %v1090 = vmax.f32 %v1026, %v1057
      %v1091 = vmax.f32 %v1027, %v1059
      %1092 = vrot.lane.b32.xlu0 %v835, 127
      %v1093 = vpop.permute.xlu0 %1092
      %1094 = vrot.lane.b32.xlu0 %v838, 127
      %v1095 = vpop.permute.xlu0 %1094
      %1096 = vrot.lane.b32.xlu0 %v841, 127
      %v1097 = vpop.permute.xlu0 %1096
      %1098 = vrot.lane.b32.xlu0 %v844, 127
      %v1099 = vpop.permute.xlu0 %1098
      %1100 = vrot.lane.b32.xlu0 %v847, 127
      %v1101 = vpop.permute.xlu0 %1100
      %1102 = vrot.lane.b32.xlu0 %v850, 127
      %v1103 = vpop.permute.xlu0 %1102
      %1104 = vrot.lane.b32.xlu0 %v853, 127
      %v1105 = vpop.permute.xlu0 %1104
      %1106 = vrot.lane.b32.xlu0 %v856, 127
      %v1107 = vpop.permute.xlu0 %1106
      %1108 = vrot.lane.b32.xlu0 %v859, 127
      %v1109 = vpop.permute.xlu0 %1108
      %1110 = vrot.lane.b32.xlu0 %v862, 127
      %v1111 = vpop.permute.xlu0 %1110
      %1112 = vrot.lane.b32.xlu0 %v865, 127
      %v1113 = vpop.permute.xlu0 %1112
      %1114 = vrot.lane.b32.xlu0 %v868, 127
      %v1115 = vpop.permute.xlu0 %1114
      %1116 = vrot.lane.b32.xlu0 %v871, 127
      %v1117 = vpop.permute.xlu0 %1116
      %1118 = vrot.lane.b32.xlu0 %v874, 127
      %v1119 = vpop.permute.xlu0 %1118
      %1120 = vrot.lane.b32.xlu0 %v877, 127
      %v1121 = vpop.permute.xlu0 %1120
      %1122 = vrot.lane.b32.xlu0 %v880, 127
      %v1123 = vpop.permute.xlu0 %1122
      %vm1140 = vcmask 605184
      %v1141 = vsel %vm1140, %v1093, 0.0
      %v1142 = vsel %vm1140, %v1095, 0.0
      %v1143 = vsel %vm1140, %v1097, 0.0
      %v1144 = vsel %vm1140, %v1099, 0.0
      %v1145 = vsel %vm1140, %v1101, 0.0
      %v1146 = vsel %vm1140, %v1103, 0.0
      %v1147 = vsel %vm1140, %v1105, 0.0
      %v1148 = vsel %vm1140, %v1107, 0.0
      %v1149 = vsel %vm1140, %v1109, 0.0
      %v1150 = vsel %vm1140, %v1111, 0.0
      %v1151 = vsel %vm1140, %v1113, 0.0
      %v1152 = vsel %vm1140, %v1115, 0.0
      %v1153 = vsel %vm1140, %v1117, 0.0
      %v1154 = vsel %vm1140, %v1119, 0.0
      %v1155 = vsel %vm1140, %v1121, 0.0
      %v1156 = vsel %vm1140, %v1123, 0.0
      %1173 = vrot.lane.b32.xlu0 %v837, 53
      %v1174 = vpop.permute.xlu0 %1173
      %1175 = vrot.lane.b32.xlu0 %v840, 53
      %v1176 = vpop.permute.xlu0 %1175
      %1177 = vrot.lane.b32.xlu0 %v843, 53
      %v1178 = vpop.permute.xlu0 %1177
      %1179 = vrot.lane.b32.xlu0 %v846, 53
      %v1180 = vpop.permute.xlu0 %1179
      %1181 = vrot.lane.b32.xlu0 %v849, 53
      %v1182 = vpop.permute.xlu0 %1181
      %1183 = vrot.lane.b32.xlu0 %v852, 53
      %v1184 = vpop.permute.xlu0 %1183
      %1185 = vrot.lane.b32.xlu0 %v855, 53
      %v1186 = vpop.permute.xlu0 %1185
      %1187 = vrot.lane.b32.xlu0 %v858, 53
      %v1188 = vpop.permute.xlu0 %1187
      %1189 = vrot.lane.b32.xlu0 %v861, 53
      %v1190 = vpop.permute.xlu0 %1189
      %1191 = vrot.lane.b32.xlu0 %v864, 53
      %v1192 = vpop.permute.xlu0 %1191
      %1193 = vrot.lane.b32.xlu0 %v867, 53
      %v1194 = vpop.permute.xlu0 %1193
      %1195 = vrot.lane.b32.xlu0 %v870, 53
      %v1196 = vpop.permute.xlu0 %1195
      %1197 = vrot.lane.b32.xlu0 %v873, 53
      %v1198 = vpop.permute.xlu0 %1197
      %1199 = vrot.lane.b32.xlu0 %v876, 53
      %v1200 = vpop.permute.xlu0 %1199
      %1201 = vrot.lane.b32.xlu0 %v879, 53
      %v1202 = vpop.permute.xlu0 %1201
      %1203 = vrot.lane.b32.xlu0 %v882, 53
      %v1204 = vpop.permute.xlu0 %1203
      %v1205 = vsel %vm979, %v918, %v1174
      %v1206 = vsel %vm979, %v922, %v1176
      %v1207 = vsel %vm979, %v926, %v1178
      %v1208 = vsel %vm979, %v930, %v1180
      %v1209 = vsel %vm979, %v934, %v1182
      %v1210 = vsel %vm979, %v938, %v1184
      %v1211 = vsel %vm979, %v942, %v1186
      %v1212 = vsel %vm979, %v946, %v1188
      %v1213 = vsel %vm979, %v950, %v1190
      %v1214 = vsel %vm979, %v954, %v1192
      %v1215 = vsel %vm979, %v958, %v1194
      %v1216 = vsel %vm979, %v962, %v1196
      %v1217 = vsel %vm979, %v966, %v1198
      %v1218 = vsel %vm979, %v970, %v1200
      %v1219 = vsel %vm979, %v974, %v1202
      %v1220 = vsel %vm979, %v978, %v1204
      %v1237 = vmax.f32 %v836, %v1205
      %v1238 = vmax.f32 %v839, %v1206
      %v1239 = vmax.f32 %v842, %v1207
      %v1240 = vmax.f32 %v845, %v1208
      %v1241 = vmax.f32 %v848, %v1209
      %v1242 = vmax.f32 %v851, %v1210
      %v1243 = vmax.f32 %v854, %v1211
      %v1244 = vmax.f32 %v857, %v1212
      %v1245 = vmax.f32 %v860, %v1213
      %v1246 = vmax.f32 %v863, %v1214
      %v1247 = vmax.f32 %v866, %v1215
      %v1248 = vmax.f32 %v869, %v1216
      %v1249 = vmax.f32 %v872, %v1217
      %v1250 = vmax.f32 %v875, %v1218
      %v1251 = vmax.f32 %v878, %v1219
      %v1252 = vmax.f32 %v881, %v1220
      %1269 = vrot.lane.b32.xlu0 %v1141, 22
      %v1270 = vpop.permute.xlu0 %1269
      %1271 = vrot.lane.b32.xlu0 %v1142, 22
      %v1272 = vpop.permute.xlu0 %1271
      %1273 = vrot.lane.b32.xlu0 %v1143, 22
      %v1274 = vpop.permute.xlu0 %1273
      %1275 = vrot.lane.b32.xlu0 %v1144, 22
      %v1276 = vpop.permute.xlu0 %1275
      %1277 = vrot.lane.b32.xlu0 %v1145, 22
      %v1278 = vpop.permute.xlu0 %1277
      %1279 = vrot.lane.b32.xlu0 %v1146, 22
      %v1280 = vpop.permute.xlu0 %1279
      %1281 = vrot.lane.b32.xlu0 %v1147, 22
      %v1282 = vpop.permute.xlu0 %1281
      %1283 = vrot.lane.b32.xlu0 %v1148, 22
      %v1284 = vpop.permute.xlu0 %1283
      %1285 = vrot.lane.b32.xlu0 %v1149, 22
      %v1286 = vpop.permute.xlu0 %1285
      %1287 = vrot.lane.b32.xlu0 %v1150, 22
      %v1288 = vpop.permute.xlu0 %1287
      %1289 = vrot.lane.b32.xlu0 %v1151, 22
      %v1290 = vpop.permute.xlu0 %1289
      %1291 = vrot.lane.b32.xlu0 %v1152, 22
      %v1292 = vpop.permute.xlu0 %1291
      %1293 = vrot.lane.b32.xlu0 %v1153, 22
      %v1294 = vpop.permute.xlu0 %1293
      %1295 = vrot.lane.b32.xlu0 %v1154, 22
      %v1296 = vpop.permute.xlu0 %1295
      %1297 = vrot.lane.b32.xlu0 %v1155, 22
      %v1298 = vpop.permute.xlu0 %1297
      %1299 = vrot.lane.b32.xlu0 %v1156, 22
      %v1300 = vpop.permute.xlu0 %1299
      %v1317 = vmax.f32 %v1237, %v1270
      %v1318 = vmax.f32 %v1238, %v1272
      %v1319 = vmax.f32 %v1239, %v1274
      %v1320 = vmax.f32 %v1240, %v1276
      %v1321 = vmax.f32 %v1241, %v1278
      %v1322 = vmax.f32 %v1242, %v1280
      %v1323 = vmax.f32 %v1243, %v1282
      %v1324 = vmax.f32 %v1244, %v1284
      %v1325 = vmax.f32 %v1245, %v1286
      %v1326 = vmax.f32 %v1246, %v1288
      %v1327 = vmax.f32 %v1247, %v1290
      %v1328 = vmax.f32 %v1248, %v1292
      %v1329 = vmax.f32 %v1249, %v1294
      %v1330 = vmax.f32 %v1250, %v1296
      %v1331 = vmax.f32 %v1251, %v1298
      %v1332 = vmax.f32 %v1252, %v1300
      %v1333 = vld [vmem:[%s346] sm:$0x1]
      %v1335 = vlaneseq
      %v1336 = vshrl.u32 %v1335, 7
      %v1337 = vsub.s32 0, %v1336
      %v1338 = vrot.slane %v1333, %v1337
      %1339 = vrot.lane.b32.xlu0 %v1338, 22
      %v1340 = vpop.permute.xlu0 %1339
      %v1342 = vmul.f32 %v1317, %v1340
      %v1343 = vmul.f32 %v1318, %v1340
      %v1344 = vmul.f32 %v1319, %v1340
      %v1345 = vmul.f32 %v1320, %v1340
      %v1346 = vmul.f32 %v1321, %v1340
      %v1347 = vmul.f32 %v1322, %v1340
      %v1348 = vmul.f32 %v1323, %v1340
      %v1349 = vmul.f32 %v1324, %v1340
      %v1350 = vmul.f32 %v1325, %v1340
      %v1351 = vmul.f32 %v1326, %v1340
      %v1352 = vmul.f32 %v1327, %v1340
      %v1353 = vmul.f32 %v1328, %v1340
      %v1354 = vmul.f32 %v1329, %v1340
      %v1355 = vmul.f32 %v1330, %v1340
      %v1356 = vmul.f32 %v1331, %v1340
      %v1357 = vmul.f32 %v1332, %v1340
      %v1358 = vld [vmem:[%s3] sm:$0xff]
      %v1359 = vld [vmem:[%s3 + $0x8] sm:$0xff]
      %v1360 = vld [vmem:[%s3 + $0x10] sm:$0xff]
      %v1361 = vld [vmem:[%s3 + $0x18] sm:$0xff]
      %v1362 = vld [vmem:[%s3 + $0x20] sm:$0xff]
      %v1363 = vld [vmem:[%s3 + $0x28] sm:$0xff]
      %v1364 = vld [vmem:[%s3 + $0x30] sm:$0xff]
      %v1365 = vld [vmem:[%s3 + $0x38] sm:$0xff]
      %1366 = vmatprep.subr.mxu0 0.0
      %1367 = vmatpush1.msra.mxu0 %v1091
      %1368 = vmatprep.subr.mxu0 0.0
      %1369 = vmatpush1.msra.mxu0 %v1090
      %1370 = vmatprep.subr.mxu0 0.0
      %1371 = vmatpush1.msra.mxu0 %v1089
      %1372 = vmatprep.subr.mxu0 0.0
      %1373 = vmatpush1.msra.mxu0 %v1088
      %1374 = vmatprep.subr.mxu0 0.0
      %1375 = vmatpush1.msra.mxu0 %v1087
      %1376 = vmatprep.subr.mxu0 0.0
      %1377 = vmatpush1.msra.mxu0 %v1086
      %1378 = vmatprep.subr.mxu0 0.0
      %1379 = vmatpush1.msra.mxu0 %v1085
      %1380 = vmatprep.subr.mxu0 0.0
      %1381 = vmatpush1.msra.mxu0 %v1084
      %1382 = vmatprep.subr.mxu0 0.0
      %1383 = vmatpush1.msra.mxu0 %v1083
      %1384 = vmatprep.subr.mxu0 0.0
      %1385 = vmatpush1.msra.mxu0 %v1082
      %1386 = vmatprep.subr.mxu0 0.0
      %1387 = vmatpush1.msra.mxu0 %v1081
      %1388 = vmatprep.subr.mxu0 0.0
      %1389 = vmatpush1.msra.mxu0 %v1080
      %1390 = vmatprep.subr.mxu0 0.0
      %1391 = vmatpush1.msra.mxu0 %v1079
      %1392 = vmatprep.subr.mxu0 0.0
      %1393 = vmatpush1.msra.mxu0 %v1078
      %1394 = vmatprep.subr.mxu0 0.0
      %1395 = vmatpush1.msra.mxu0 %v1077
      %1396 = vmatprep.subr.mxu0 0.0
      %1397 = vmatpush1.msra.mxu0 %v1076
      %1398 = vmatprep.subr.mxu0 0.0
      %1399 = vmatpush2.msra.mxu0 0.0
      %1400 = vmatprep.subr.mxu0 0.0
      %1401 = vmatpush2.msra.mxu0 0.0
      %1402 = vmatprep.subr.mxu0 0.0
      %1403 = vmatpush2.msra.mxu0 0.0
      %1404 = vmatprep.subr.mxu0 0.0
      %1405 = vmatpush2.msra.mxu0 0.0
      %1406 = vmatprep.subr.mxu0 0.0
      %1407 = vmatpush2.msra.mxu0 0.0
      %1408 = vmatprep.subr.mxu0 0.0
      %1409 = vmatpush2.msra.mxu0 0.0
      %1410 = vmatprep.subr.mxu0 0.0
      %1411 = vmatpush2.msra.mxu0 0.0
      %1412 = vmatprep.subr.mxu0 0.0
      %1413 = vmatpush2.msra.mxu0 0.0
      %1414 = vmatprep.subr.mxu0 0.0
      %1415 = vmatpush2.msra.mxu0 0.0
      %1416 = vmatprep.subr.mxu0 0.0
      %1417 = vmatpush2.msra.mxu0 0.0
      %1418 = vmatprep.subr.mxu0 0.0
      %1419 = vmatpush2.msra.mxu0 0.0
      %1420 = vmatprep.subr.mxu0 0.0
      %1421 = vmatpush2.msra.mxu0 0.0
      %1422 = vmatprep.subr.mxu0 0.0
      %1423 = vmatpush2.msra.mxu0 0.0
      %1424 = vmatprep.subr.mxu0 0.0
      %1425 = vmatpush2.msra.mxu0 0.0
      %1426 = vmatprep.subr.mxu0 0.0
      %1427 = vmatpush2.msra.mxu0 0.0
      %1428 = vmatprep.subr.mxu0 0.0
      %1429 = vmatpush2.msra.mxu0 0.0
      %1430 = vmatprep.mubr.f32.mxu0 0.0
      %1431 = vmatmul.mubr.f32.gmra.mxu0 %v1358
      %v1432 = vpop.f32.mrf.mxu0
      %v1433 = vadd.f32 0.0, %v1432
      %v1434 = vpop.f32.mrf.mxu0
      %1435 = vmatprep.mubr.f32.mxu0 0.0
      %1436 = vmatmul.mubr.f32.gmra.mxu0 %v1359
      %v1437 = vpop.f32.mrf.mxu0
      %v1438 = vadd.f32 0.0, %v1437
      %v1439 = vpop.f32.mrf.mxu0
      %1440 = vmatprep.mubr.f32.mxu0 0.0
      %1441 = vmatmul.mubr.f32.gmra.mxu0 %v1360
      %v1442 = vpop.f32.mrf.mxu0
      %v1443 = vadd.f32 0.0, %v1442
      %v1444 = vpop.f32.mrf.mxu0
      %1445 = vmatprep.mubr.f32.mxu0 0.0
      %1446 = vmatmul.mubr.f32.gmra.mxu0 %v1361
      %v1447 = vpop.f32.mrf.mxu0
      %v1448 = vadd.f32 0.0, %v1447
      %v1449 = vpop.f32.mrf.mxu0
      %1450 = vmatprep.mubr.f32.mxu0 0.0
      %1451 = vmatmul.mubr.f32.gmra.mxu0 %v1362
      %v1452 = vpop.f32.mrf.mxu0
      %v1453 = vadd.f32 0.0, %v1452
      %v1454 = vpop.f32.mrf.mxu0
      %1455 = vmatprep.mubr.f32.mxu0 0.0
      %1456 = vmatmul.mubr.f32.gmra.mxu0 %v1363
      %v1457 = vpop.f32.mrf.mxu0
      %v1458 = vadd.f32 0.0, %v1457
      %v1459 = vpop.f32.mrf.mxu0
      %1460 = vmatprep.mubr.f32.mxu0 0.0
      %1461 = vmatmul.mubr.f32.gmra.mxu0 %v1364
      %v1462 = vpop.f32.mrf.mxu0
      %v1463 = vadd.f32 0.0, %v1462
      %v1464 = vpop.f32.mrf.mxu0
      %1465 = vmatprep.mubr.f32.mxu0 0.0
      %1466 = vmatmul.mubr.f32.gmra.mxu0 %v1365
      %v1467 = vpop.f32.mrf.mxu0
      %v1468 = vadd.f32 0.0, %v1467
      %v1469 = vpop.f32.mrf.mxu0
      %1470 = vdwg.mxu0
      %1487 = vrot.lane.b32.xlu0 %v1342, 106
      %v1488 = vpop.permute.xlu0 %1487
      %1489 = vrot.lane.b32.xlu0 %v1343, 106
      %v1490 = vpop.permute.xlu0 %1489
      %1491 = vrot.lane.b32.xlu0 %v1344, 106
      %v1492 = vpop.permute.xlu0 %1491
      %1493 = vrot.lane.b32.xlu0 %v1345, 106
      %v1494 = vpop.permute.xlu0 %1493
      %1495 = vrot.lane.b32.xlu0 %v1346, 106
      %v1496 = vpop.permute.xlu0 %1495
      %1497 = vrot.lane.b32.xlu0 %v1347, 106
      %v1498 = vpop.permute.xlu0 %1497
      %1499 = vrot.lane.b32.xlu0 %v1348, 106
      %v1500 = vpop.permute.xlu0 %1499
      %1501 = vrot.lane.b32.xlu0 %v1349, 106
      %v1502 = vpop.permute.xlu0 %1501
      %1503 = vrot.lane.b32.xlu0 %v1350, 106
      %v1504 = vpop.permute.xlu0 %1503
      %1505 = vrot.lane.b32.xlu0 %v1351, 106
      %v1506 = vpop.permute.xlu0 %1505
      %1507 = vrot.lane.b32.xlu0 %v1352, 106
      %v1508 = vpop.permute.xlu0 %1507
      %1509 = vrot.lane.b32.xlu0 %v1353, 106
      %v1510 = vpop.permute.xlu0 %1509
      %1511 = vrot.lane.b32.xlu0 %v1354, 106
      %v1512 = vpop.permute.xlu0 %1511
      %1513 = vrot.lane.b32.xlu0 %v1355, 106
      %v1514 = vpop.permute.xlu0 %1513
      %1515 = vrot.lane.b32.xlu0 %v1356, 106
      %v1516 = vpop.permute.xlu0 %1515
      %1517 = vrot.lane.b32.xlu0 %v1357, 106
      %v1518 = vpop.permute.xlu0 %1517
      %1535 = vmatprep.subr.mxu0 0.0
      %1536 = vmatpush1.msra.mxu0 %v1518
      %1537 = vmatprep.subr.mxu0 0.0
      %1538 = vmatpush1.msra.mxu0 %v1516
      %1539 = vmatprep.subr.mxu0 0.0
      %1540 = vmatpush1.msra.mxu0 %v1514
      %1541 = vmatprep.subr.mxu0 0.0
      %1542 = vmatpush1.msra.mxu0 %v1512
      %1543 = vmatprep.subr.mxu0 0.0
      %1544 = vmatpush1.msra.mxu0 %v1510
      %1545 = vmatprep.subr.mxu0 0.0
      %1546 = vmatpush1.msra.mxu0 %v1508
      %1547 = vmatprep.subr.mxu0 0.0
      %1548 = vmatpush1.msra.mxu0 %v1506
      %1549 = vmatprep.subr.mxu0 0.0
      %1550 = vmatpush1.msra.mxu0 %v1504
      %1551 = vmatprep.subr.mxu0 0.0
      %1552 = vmatpush1.msra.mxu0 %v1502
      %1553 = vmatprep.subr.mxu0 0.0
      %1554 = vmatpush1.msra.mxu0 %v1500
      %1555 = vmatprep.subr.mxu0 0.0
      %1556 = vmatpush1.msra.mxu0 %v1498
      %1557 = vmatprep.subr.mxu0 0.0
      %1558 = vmatpush1.msra.mxu0 %v1496
      %1559 = vmatprep.subr.mxu0 0.0
      %1560 = vmatpush1.msra.mxu0 %v1494
      %1561 = vmatprep.subr.mxu0 0.0
      %1562 = vmatpush1.msra.mxu0 %v1492
      %1563 = vmatprep.subr.mxu0 0.0
      %1564 = vmatpush1.msra.mxu0 %v1490
      %1565 = vmatprep.subr.mxu0 0.0
      %1566 = vmatpush1.msra.mxu0 %v1488
      %1567 = vmatprep.subr.mxu0 0.0
      %1568 = vmatpush2.msra.mxu0 0.0
      %1569 = vmatprep.subr.mxu0 0.0
      %1570 = vmatpush2.msra.mxu0 0.0
      %1571 = vmatprep.subr.mxu0 0.0
      %1572 = vmatpush2.msra.mxu0 0.0
      %1573 = vmatprep.subr.mxu0 0.0
      %1574 = vmatpush2.msra.mxu0 0.0
      %1575 = vmatprep.subr.mxu0 0.0
      %1576 = vmatpush2.msra.mxu0 0.0
      %1577 = vmatprep.subr.mxu0 0.0
      %1578 = vmatpush2.msra.mxu0 0.0
      %1579 = vmatprep.subr.mxu0 0.0
      %1580 = vmatpush2.msra.mxu0 0.0
      %1581 = vmatprep.subr.mxu0 0.0
      %1582 = vmatpush2.msra.mxu0 0.0
      %1583 = vmatprep.subr.mxu0 0.0
      %1584 = vmatpush2.msra.mxu0 0.0
      %1585 = vmatprep.subr.mxu0 0.0
      %1586 = vmatpush2.msra.mxu0 0.0
      %1587 = vmatprep.subr.mxu0 0.0
      %1588 = vmatpush2.msra.mxu0 0.0
      %1589 = vmatprep.subr.mxu0 0.0
      %1590 = vmatpush2.msra.mxu0 0.0
      %1591 = vmatprep.subr.mxu0 0.0
      %1592 = vmatpush2.msra.mxu0 0.0
      %1593 = vmatprep.subr.mxu0 0.0
      %1594 = vmatpush2.msra.mxu0 0.0
      %1595 = vmatprep.subr.mxu0 0.0
      %1596 = vmatpush2.msra.mxu0 0.0
      %1597 = vmatprep.subr.mxu0 0.0
      %1598 = vmatpush2.msra.mxu0 0.0
      %1599 = vmatprep.mubr.f32.mxu0 0.0
      %1600 = vmatmul.mubr.f32.gmra.mxu0 %v1358
      %v1601 = vpop.f32.mrf.mxu0
      %v1602 = vadd.f32 0.0, %v1601
      %v1603 = vpop.f32.mrf.mxu0
      %1604 = vmatprep.mubr.f32.mxu0 0.0
      %1605 = vmatmul.mubr.f32.gmra.mxu0 %v1359
      %v1606 = vpop.f32.mrf.mxu0
      %v1607 = vadd.f32 0.0, %v1606
      %v1608 = vpop.f32.mrf.mxu0
      %1609 = vmatprep.mubr.f32.mxu0 0.0
      %1610 = vmatmul.mubr.f32.gmra.mxu0 %v1360
      %v1611 = vpop.f32.mrf.mxu0
      %v1612 = vadd.f32 0.0, %v1611
      %v1613 = vpop.f32.mrf.mxu0
      %1614 = vmatprep.mubr.f32.mxu0 0.0
      %1615 = vmatmul.mubr.f32.gmra.mxu0 %v1361
      %v1616 = vpop.f32.mrf.mxu0
      %v1617 = vadd.f32 0.0, %v1616
      %v1618 = vpop.f32.mrf.mxu0
      %1619 = vmatprep.mubr.f32.mxu0 0.0
      %1620 = vmatmul.mubr.f32.gmra.mxu0 %v1362
      %v1621 = vpop.f32.mrf.mxu0
      %v1622 = vadd.f32 0.0, %v1621
      %v1623 = vpop.f32.mrf.mxu0
      %1624 = vmatprep.mubr.f32.mxu0 0.0
      %1625 = vmatmul.mubr.f32.gmra.mxu0 %v1363
      %v1626 = vpop.f32.mrf.mxu0
      %v1627 = vadd.f32 0.0, %v1626
      %v1628 = vpop.f32.mrf.mxu0
      %1629 = vmatprep.mubr.f32.mxu0 0.0
      %1630 = vmatmul.mubr.f32.gmra.mxu0 %v1364
      %v1631 = vpop.f32.mrf.mxu0
      %v1632 = vadd.f32 0.0, %v1631
      %v1633 = vpop.f32.mrf.mxu0
      %1634 = vmatprep.mubr.f32.mxu0 0.0
      %1635 = vmatmul.mubr.f32.gmra.mxu0 %v1365
      %v1636 = vpop.f32.mrf.mxu0
      %v1637 = vadd.f32 0.0, %v1636
      %v1638 = vpop.f32.mrf.mxu0
      %1639 = vdwg.mxu0
      %1644 = vrot.lane.b32.xlu0 %v1602, 1
      %v1645 = vpop.permute.xlu0 %1644
      %1646 = vrot.lane.b32.xlu0 %v1607, 1
      %v1647 = vpop.permute.xlu0 %1646
      %1648 = vrot.lane.b32.xlu0 %v1612, 1
      %v1649 = vpop.permute.xlu0 %1648
      %1650 = vrot.lane.b32.xlu0 %v1617, 1
      %v1651 = vpop.permute.xlu0 %1650
      %vm1656 = vcmask 7168
      %v1657 = vsel %vm1656, 0.0, %v1645
      %v1658 = vsel %vm1656, 0.0, %v1647
      %v1659 = vsel %vm1656, 0.0, %v1649
      %v1660 = vsel %vm1656, 0.0, %v1651
      %v1661 = vadd.f32 %v1453, %v1657
      %v1662 = vadd.f32 %v1458, %v1658
      %v1663 = vadd.f32 %v1463, %v1659
      %v1664 = vadd.f32 %v1468, %v1660
      %v1665 = vadd.f32 %v1433, %v1622
      %v1666 = vadd.f32 %v1438, %v1627
      %v1667 = vadd.f32 %v1443, %v1632
      %v1668 = vadd.f32 %v1448, %v1637
      %v1669 = vld [vmem:[%s4] sm:$0xff]
      %v1670 = vld [vmem:[%s4 + $0x8] sm:$0xff]
      %v1671 = vld [vmem:[%s4 + $0x10] sm:$0xff]
      %v1672 = vld [vmem:[%s4 + $0x18] sm:$0xff]
      %1674 = vset.pattern.permute.xlu0 0
      %1675 = vperm.xlu0 %1674, %v1669
      %v1676 = vpop.permute.xlu0 %1675
      %1679 = vset.pattern.permute.xlu0 0
      %1680 = vperm.xlu0 %1679, %v1670
      %v1681 = vpop.permute.xlu0 %1680
      %1684 = vset.pattern.permute.xlu0 0
      %1685 = vperm.xlu0 %1684, %v1671
      %v1686 = vpop.permute.xlu0 %1685
      %1689 = vset.pattern.permute.xlu0 0
      %1690 = vperm.xlu0 %1689, %v1672
      %v1691 = vpop.permute.xlu0 %1690
      %v1693 = vadd.f32 %v1661, %v1676
      %v1694 = vadd.f32 %v1662, %v1681
      %v1695 = vadd.f32 %v1663, %v1686
      %v1696 = vadd.f32 %v1664, %v1691
      %v1697 = vmax.f32 %v1693, 0.0
      %v1698 = vmax.f32 %v1694, 0.0
      %v1699 = vmax.f32 %v1695, 0.0
      %v1700 = vmax.f32 %v1696, 0.0
      %v1701 = vadd.f32 %v1665, %v1676
      %v1702 = vadd.f32 %v1666, %v1681
      %v1703 = vadd.f32 %v1667, %v1686
      %v1704 = vadd.f32 %v1668, %v1691
      %v1705 = vmax.f32 %v1701, 0.0
      %v1706 = vmax.f32 %v1702, 0.0
      %v1707 = vmax.f32 %v1703, 0.0
      %v1708 = vmax.f32 %v1704, 0.0
      %v1709 = vmax.f32 %v1697, %v1705
      %v1710 = vmax.f32 %v1698, %v1706
      %v1711 = vmax.f32 %v1699, %v1707
      %v1712 = vmax.f32 %v1700, %v1708
      %v1713 = vld [vmem:[%s340] sm:$0xff]
      %v1714 = vld [vmem:[%s340 + $0x8] sm:$0xff]
      %v1715 = vld [vmem:[%s340 + $0x10] sm:$0xff]
      %v1716 = vld [vmem:[%s340 + $0x18] sm:$0xff]
      %v1717 = vmul.f32 %v1709, %v1713
      %v1718 = vmul.f32 %v1710, %v1714
      %v1719 = vmul.f32 %v1711, %v1715
      %v1720 = vmul.f32 %v1712, %v1716
      %vm1721 = vcmask 613376
      %v1722 = vsel %vm1721, %v1717, 0.0
      %1723 = vadd.xlane.f32.xlu0 %v1722
      %v1724 = vpop.xlane.xlu0 %1723
      %v1725 = vsel %vm1721, %v1718, 0.0
      %1726 = vadd.xlane.f32.xlu0 %v1725
      %v1727 = vpop.xlane.xlu0 %1726
      %v1728 = vsel %vm1721, %v1719, 0.0
      %1729 = vadd.xlane.f32.xlu0 %v1728
      %v1730 = vpop.xlane.xlu0 %1729
      %v1731 = vsel %vm1721, %v1720, 0.0
      %1732 = vadd.xlane.f32.xlu0 %v1731
      %v1733 = vpop.xlane.xlu0 %1732
      %v1734 = vadd.f32 %v1724, %v1727
      %v1735 = vrot.slane %v1734, 4
      %v1736 = vadd.f32 %v1734, %v1735
      %v1737 = vrot.slane %v1736, 2
      %v1738 = vadd.f32 %v1736, %v1737
      %v1739 = vrot.slane %v1738, 1
      %v1740 = vadd.f32 %v1738, %v1739
      %v1741 = vld [vmem:[%s343] sm:$0x1]
      %v1742 = vadd.f32 %v1740, %v1741
      %v1743 = vadd.f32 %v1730, %v1733
      %v1744 = vrot.slane %v1743, 4
      %v1745 = vadd.f32 %v1743, %v1744
      %v1746 = vrot.slane %v1745, 2
      %v1747 = vadd.f32 %v1745, %v1746
      %v1748 = vrot.slane %v1747, 1
      %v1749 = vadd.f32 %v1747, %v1748
      %v1750 = vadd.f32 %v1749, %v1741
      %v1752 = vlaneseq
      %v1753 = vshrl.u32 %v1752, 7
      %v1754 = vsub.s32 0, %v1753
      %v1755 = vrot.slane %v1750, %v1754
      %1756 = vrot.lane.b32.xlu0 %v1755, 1
      %v1757 = vpop.permute.xlu0 %1756
      %v1759 = vsel %vm1656, %v1742, %v1757
      %vm1760 = vcmask 8192
      %1761 = vst.msk [vmem:[%s349] sm:$0x1] %vm1760, %v1759
      %p1762 = scmp.lt.s32.totalorder %s19, 1
      %s1763 = scalar_select %p1762, %s19, 1
      %s1764 = scalar_lea.vmem %s8, %s1763
      // Predicated region
      $region53: #{_readout_forward.1} parent=51 // pred_check
        %p1765 = pneg %p225
      $region54: #{_readout_forward.1} parent=51 // pred_check_branch
        %1767 = sbr.rel (%p1765) target = $region56
      $region55: #{_readout_forward.1} parent=51 // pred_region
        _
      $region56: #{_readout_forward.1} parent=51 // pred_fallthru
        _
    $region52: #{_readout_forward.1} parent=5 // pred_fallthru
      _
    %p1768 = scmp.le.s32.totalorder 2, %s14
    // Predicated region
    $region57: #{_readout_forward.1} parent=5 // pred_check
      %p1769 = pneg %p1768
    $region58: #{_readout_forward.1} parent=5 // pred_check_branch
      %1771 = sbr.rel (%p1769) target = $region60
    $region59: #{_readout_forward.1} parent=5 // pred_region
      %s1772 = ssub.s32 %s14, 2
      // Predicated region
      $region61: #{_readout_forward.1} parent=59 // pred_check
        %p1773 = pneg %p231
      $region62: #{_readout_forward.1} parent=59 // pred_check_branch
        %1775 = sbr.rel (%p1773) target = $region64
      $region63: #{_readout_forward.1} parent=59 // pred_region
        %p1776 = scmp.lt.s32.totalorder %s20, 1
        %s1777 = scalar_select %p1776, %s20, 1
        %s1778 = scalar_lea.vmem %s8, %s1777
      $region64: #{_readout_forward.1} parent=59 // pred_fallthru
        _
    $region60: #{_readout_forward.1} parent=5 // pred_fallthru
      _
  $region6: #{_readout_forward.1} parent=0 // loop_footer
    %s18 = sadd.s32 1, %s14
  $region7: #{_readout_forward.1} parent=0 // loop_footer_branch
    %13 = sbr.rel target = $region3
  $region8: #{_readout_forward.1} parent=0 // loop_exit
    _

</llo_original>
